<compile_context>
chip_gen: v7x
topology: tpu7x:2x2x1
jax: 0.10.0
libtpu: 0.0.40
codegen_flags: <defaults>
</compile_context>

<pallas_src>
import jax
import jax.numpy as jnp
from jax.experimental import pallas as pl
from jax.experimental.pallas import tpu as pltpu


def _bilstm_fc_kernel(x_ref,                        # (T, B, F)  f32, time-major
                      wih_ref,                      # (F, 8H)    f32, [W_ih_fwd | W_ih_rev]
                      b_ref,                        # (1, 8H)    f32, fused b_ih+b_hh both dirs
                      whh_ref,                      # (H, 4H)    bf16, forward recurrent weight
                      w1f_ref, w1b_ref, b1_ref,     # (H,HID) (H,HID) (1,HID) f32
                      w2_ref, b2_ref,               # (HID,C) (1,C) f32
                      out_ref):                     # (B, C)  f32
    T = x_ref.shape[0]
    H = whh_ref.shape[0]

    wih = wih_ref[...]
    bias = b_ref[...]
    whh = whh_ref[...]

    def proj(t):
        # Input projection of step t for BOTH directions in one (B,F)@(F,8H) dot
        # (+ fused bias). Independent of the recurrent state, so the scheduler
        # pulls it off the serial critical path.
        return jnp.dot(x_ref[t], wih, preferred_element_type=jnp.float32) + bias

    def gate_math(gates, c):
        # gates: (B, 4H) pre-activations, PyTorch gate order [i, f, g, o].
        # One full-width sigmoid push (4H == 128 lanes == one vreg) + quarter-width tanh.
        sig = jax.nn.sigmoid(gates)
        i = sig[:, 0 * H:1 * H]
        f = sig[:, 1 * H:2 * H]
        o = sig[:, 3 * H:4 * H]
        g = jnp.tanh(gates[:, 2 * H:3 * H])
        c_new = i * g if c is None else f * c + i * g
        h_new = o * jnp.tanh(c_new)
        return h_new, c_new

    # ---- forward recurrence, fully unrolled (T static & small) ----
    # Step 0: h0 = c0 = 0, so the h @ W_hh dot and f*c terms vanish exactly.
    gx = proj(0)
    h, c = gate_math(gx[:, :4 * H], None)
    for t in range(1, T):
        gx = proj(t)
        # Recurrent matmul with bf16 operands (MXU-native), f32 accumulation.
        gates = gx[:, :4 * H] + jnp.dot(h.astype(jnp.bfloat16), whh,
                                        preferred_element_type=jnp.float32)
        h, c = gate_math(gates, c)
    h_fwd = h

    # ---- reverse direction ----
    # out[:, -1, H:] is the reverse LSTM's FIRST step from the zero state (it has
    # only seen x[:, T-1]) => h0 @ W_hh_r == 0 and c0 == 0; W_hh_r is never needed.
    # Its input projection is already in gx[:, 4H:] from the fused weight (t = T-1).
    h_bwd, _ = gate_math(gx[:, 4 * H:], None)

    # ---- FC head: no lane concat; fc1 rows split across the two directions ----
    # Keep the two accumulating dots adjacent (v7x MRB in-place accumulation).
    z = (jnp.dot(h_fwd, w1f_ref[...], preferred_element_type=jnp.float32)
         + jnp.dot(h_bwd, w1b_ref[...], preferred_element_type=jnp.float32)
         + b1_ref[...])
    z = jnp.maximum(z, 0.0)                          # ReLU; Dropout = identity (eval)
    logits = (jnp.dot(z, w2_ref[...], preferred_element_type=jnp.float32)
              + b2_ref[...])

    m = jnp.max(logits, axis=-1, keepdims=True)
    e = jnp.exp(logits - m)
    denom = jnp.sum(e, axis=-1, keepdims=True)
    out_ref[...] = e * pl.reciprocal(denom, approx=True)


def init_params(key, input_size, rnn_size, hidden_size, n_classes):
    """Deterministic synthetic init matching the PyTorch parameter shapes."""
    H = rnn_size
    ks = jax.random.split(key, 12)
    bl = 1.0 / float(jnp.sqrt(H))
    b1s = 1.0 / float(jnp.sqrt(2 * H))
    b2s = 1.0 / float(jnp.sqrt(hidden_size))

    def u(k, shape, bound):
        return jax.random.uniform(k, shape, jnp.float32, -bound, bound)

    return dict(
        wih_f=u(ks[0], (4 * H, input_size), bl),
        whh_f=u(ks[1], (4 * H, H), bl),
        bih_f=u(ks[2], (4 * H,), bl),
        bhh_f=u(ks[3], (4 * H,), bl),
        wih_r=u(ks[4], (4 * H, input_size), bl),
        whh_r=u(ks[5], (4 * H, H), bl),
        bih_r=u(ks[6], (4 * H,), bl),
        bhh_r=u(ks[7], (4 * H,), bl),
        w1=u(ks[8], (hidden_size, 2 * H), b1s),
        b1=u(ks[9], (hidden_size,), b1s),
        w2=u(ks[10], (n_classes, hidden_size), b2s),
        b2=u(ks[11], (n_classes,), b2s),
    )


def prepare_params(params):
    """One-time (outside jit) weight prep: lane-dense transposes, fused biases,
    fused [fwd|rev] input projection, bf16 recurrent weight."""
    H = params["whh_f"].shape[1]
    w1 = params["w1"]                                              # (HID, 2H)
    wih = jnp.concatenate([params["wih_f"].T, params["wih_r"].T], axis=1)   # (F, 8H)
    b = jnp.concatenate([params["bih_f"] + params["bhh_f"],
                         params["bih_r"] + params["bhh_r"]])[None, :]       # (1, 8H)
    return dict(
        wih=jnp.asarray(wih, jnp.float32),
        b=jnp.asarray(b, jnp.float32),
        whh_f=jnp.asarray(params["whh_f"].T, jnp.bfloat16),        # (H, 4H), MXU-native
        w1f=jnp.asarray(w1[:, :H].T, jnp.float32),                 # (H, HID) for h_fwd
        w1b=jnp.asarray(w1[:, H:].T, jnp.float32),                 # (H, HID) for h_bwd
        b1=jnp.asarray(params["b1"][None, :], jnp.float32),
        w2=jnp.asarray(params["w2"].T, jnp.float32),               # (HID, C)
        b2=jnp.asarray(params["b2"][None, :], jnp.float32),
    )


@jax.jit
def bilstm_classifier_forward(x, prep):
    """x: (B, T, F) float32 -> (B, n_classes) softmax probabilities."""
    B = x.shape[0]
    C = prep["w2"].shape[1]
    # Single wrapper-side op: time-major so the kernel indexes x[t] along the free
    # leading axis. No batch padding, no reshape, no output slice.
    x_tm = jnp.swapaxes(x, 0, 1).astype(jnp.float32)               # (T, B, F)

    args = (x_tm, prep["wih"], prep["b"], prep["whh_f"],
            prep["w1f"], prep["w1b"], prep["b1"], prep["w2"], prep["b2"])

    vmem = pl.BlockSpec(memory_space=pltpu.MemorySpace.VMEM)
    return pl.pallas_call(
        _bilstm_fc_kernel,
        out_shape=jax.ShapeDtypeStruct((B, C), jnp.float32),
        in_specs=[vmem] * len(args),
        out_specs=vmem,
    )(*args)


def _reference_forward(x, params):
    """Pure-JAX f32 reference matching the PyTorch eval-mode forward."""
    B, T, _ = x.shape
    H = params["whh_f"].shape[1]

    def cell(x_t, h, c, wih, whh, bih, bhh):
        gates = x_t @ wih.T + h @ whh.T + bih + bhh
        i = jax.nn.sigmoid(gates[:, 0 * H:1 * H])
        f = jax.nn.sigmoid(gates[:, 1 * H:2 * H])
        g = jnp.tanh(gates[:, 2 * H:3 * H])
        o = jax.nn.sigmoid(gates[:, 3 * H:4 * H])
        c = f * c + i * g
        h = o * jnp.tanh(c)
        return h, c

    h = jnp.zeros((B, H), jnp.float32)
    c = jnp.zeros((B, H), jnp.float32)
    for t in range(T):
        h, c = cell(x[:, t], h, c, params["wih_f"], params["whh_f"],
                    params["bih_f"], params["bhh_f"])
    h_fwd = h

    h = jnp.zeros((B, H), jnp.float32)
    c = jnp.zeros((B, H), jnp.float32)
    rev_out = [None] * T
    for t in range(T - 1, -1, -1):
        h, c = cell(x[:, t], h, c, params["wih_r"], params["whh_r"],
                    params["bih_r"], params["bhh_r"])
        rev_out[t] = h
    h_bwd = rev_out[T - 1]                                         # == out[:, -1, H:]

    feat = jnp.concatenate([h_fwd, h_bwd], axis=-1)
    z = jnp.maximum(feat @ params["w1"].T + params["b1"], 0.0)
    logits = z @ params["w2"].T + params["b2"]
    return jax.nn.softmax(logits, axis=-1)


if __name__ == "__main__":
    # Small shapes implied by the module: (batch, seq_len, n_features_in_)
    batch, seq_len, n_features = 2, 8, 4
    rnn_size, hidden_size, n_classes = 32, 32, 3

    key = jax.random.PRNGKey(0)
    kx, kp = jax.random.split(key)
    x = jax.random.normal(kx, (batch, seq_len, n_features), jnp.float32)
    params = init_params(kp, n_features, rnn_size, hidden_size, n_classes)
    prep = prepare_params(params)        # one-time weight prep, outside the jitted forward

    out = bilstm_classifier_forward(x, prep)
    out = jax.block_until_ready(out)

    assert out.shape == (batch, n_classes)
    assert bool(jnp.all(jnp.isfinite(out)))
    # Rows are softmax distributions (approx reciprocal => loose tolerance on the sum).
    assert jnp.allclose(jnp.sum(out, axis=-1), 1.0, atol=1e-2)

    ref = _reference_forward(x, params)
    # bf16 recurrent-matmul operands + approx reciprocal => slightly looser tolerance.
    assert jnp.allclose(out, ref, atol=1e-2), float(jnp.max(jnp.abs(out - ref)))
    print("KERNEL_OK")
</pallas_src>

<mosaic_0001>
module attributes {stable_mosaic.version = 11 : i64} {
  func.func @_bilstm_fc_kernel(%arg0: memref<8x2x4xf32, #tpu.memory_space<vmem>>, %arg1: memref<4x256xf32, #tpu.memory_space<vmem>>, %arg2: memref<1x256xf32, #tpu.memory_space<vmem>>, %arg3: memref<32x128xbf16, #tpu.memory_space<vmem>>, %arg4: memref<32x32xf32, #tpu.memory_space<vmem>>, %arg5: memref<32x32xf32, #tpu.memory_space<vmem>>, %arg6: memref<1x32xf32, #tpu.memory_space<vmem>>, %arg7: memref<32x3xf32, #tpu.memory_space<vmem>>, %arg8: memref<1x3xf32, #tpu.memory_space<vmem>>, %arg9: memref<2x3xf32, #tpu.memory_space<vmem>>) attributes {dimension_semantics = [], scalar_prefetch = 0 : i64, scratch_operands = 0 : i64, tpu.core_type = #tpu.core_type<tc>} {
    %c0 = arith.constant 0 : index
    %c0_0 = arith.constant 0 : index
    %0 = vector.load %arg1[%c0, %c0_0] : memref<4x256xf32, #tpu.memory_space<vmem>>, vector<4x256xf32>
    %c0_1 = arith.constant 0 : index
    %c0_2 = arith.constant 0 : index
    %1 = vector.load %arg2[%c0_1, %c0_2] : memref<1x256xf32, #tpu.memory_space<vmem>>, vector<1x256xf32>
    %c0_3 = arith.constant 0 : index
    %c0_4 = arith.constant 0 : index
    %2 = vector.load %arg3[%c0_3, %c0_4] : memref<32x128xbf16, #tpu.memory_space<vmem>>, vector<32x128xbf16>
    %c0_5 = arith.constant 0 : index
    %c0_6 = arith.constant 0 : index
    %c0_7 = arith.constant 0 : index
    %3 = vector.load %arg0[%c0_5, %c0_6, %c0_7] : memref<8x2x4xf32, #tpu.memory_space<vmem>>, vector<1x2x4xf32>
    %4 = vector.shape_cast %3 : vector<1x2x4xf32> to vector<2x4xf32>
    %cst = arith.constant dense<0.000000e+00> : vector<2x256xf32>
    %5 = tpu.matmul %4, %0, %cst {dimension_numbers = #tpu.dot_dimension_numbers<[1], [0], [0], [1], [0, 0, 1, 1], [], []>} : vector<2x4xf32>, vector<4x256xf32>, vector<2x256xf32> -> vector<2x256xf32>
    %6 = vector.broadcast %1 : vector<1x256xf32> to vector<2x256xf32>
    %7 = arith.addf %5, %6 : vector<2x256xf32>
    %8 = vector.extract_strided_slice %7 {offsets = [0, 0], sizes = [2, 128], strides = [1, 1]} : vector<2x256xf32> to vector<2x128xf32>
    %9 = arith.negf %8 : vector<2x128xf32>
    %10 = math.exp %9 : vector<2x128xf32>
    %cst_8 = arith.constant 1.000000e+00 : f32
    %11 = vector.broadcast %cst_8 : f32 to vector<2x128xf32>
    %12 = arith.addf %11, %10 : vector<2x128xf32>
    %13 = arith.divf %11, %12 : vector<2x128xf32>
    %14 = vector.extract_strided_slice %13 {offsets = [0, 0], sizes = [2, 32], strides = [1, 1]} : vector<2x128xf32> to vector<2x32xf32>
    %15 = vector.extract_strided_slice %13 {offsets = [0, 96], sizes = [2, 32], strides = [1, 1]} : vector<2x128xf32> to vector<2x32xf32>
    %16 = vector.extract_strided_slice %8 {offsets = [0, 64], sizes = [2, 32], strides = [1, 1]} : vector<2x128xf32> to vector<2x32xf32>
    %17 = math.tanh %16 : vector<2x32xf32>
    %18 = arith.mulf %14, %17 : vector<2x32xf32>
    %19 = math.tanh %18 : vector<2x32xf32>
    %20 = arith.mulf %15, %19 : vector<2x32xf32>
    %c1 = arith.constant 1 : index
    %c0_9 = arith.constant 0 : index
    %c0_10 = arith.constant 0 : index
    %21 = vector.load %arg0[%c1, %c0_9, %c0_10] : memref<8x2x4xf32, #tpu.memory_space<vmem>>, vector<1x2x4xf32>
    %22 = vector.shape_cast %21 : vector<1x2x4xf32> to vector<2x4xf32>
    %cst_11 = arith.constant dense<0.000000e+00> : vector<2x256xf32>
    %23 = tpu.matmul %22, %0, %cst_11 {dimension_numbers = #tpu.dot_dimension_numbers<[1], [0], [0], [1], [0, 0, 1, 1], [], []>} : vector<2x4xf32>, vector<4x256xf32>, vector<2x256xf32> -> vector<2x256xf32>
    %24 = vector.broadcast %1 : vector<1x256xf32> to vector<2x256xf32>
    %25 = arith.addf %23, %24 : vector<2x256xf32>
    %26 = vector.extract_strided_slice %25 {offsets = [0, 0], sizes = [2, 128], strides = [1, 1]} : vector<2x256xf32> to vector<2x128xf32>
    %27 = arith.truncf %20 : vector<2x32xf32> to vector<2x32xbf16>
    %cst_12 = arith.constant dense<0.000000e+00> : vector<2x128xf32>
    %28 = tpu.matmul %27, %2, %cst_12 {dimension_numbers = #tpu.dot_dimension_numbers<[1], [0], [0], [1], [0, 0, 1, 1], [], []>} : vector<2x32xbf16>, vector<32x128xbf16>, vector<2x128xf32> -> vector<2x128xf32>
    %29 = arith.addf %26, %28 : vector<2x128xf32>
    %30 = arith.negf %29 : vector<2x128xf32>
    %31 = math.exp %30 : vector<2x128xf32>
    %cst_13 = arith.constant 1.000000e+00 : f32
    %32 = vector.broadcast %cst_13 : f32 to vector<2x128xf32>
    %33 = arith.addf %32, %31 : vector<2x128xf32>
    %34 = arith.divf %32, %33 : vector<2x128xf32>
    %35 = vector.extract_strided_slice %34 {offsets = [0, 0], sizes = [2, 32], strides = [1, 1]} : vector<2x128xf32> to vector<2x32xf32>
    %36 = vector.extract_strided_slice %34 {offsets = [0, 32], sizes = [2, 32], strides = [1, 1]} : vector<2x128xf32> to vector<2x32xf32>
    %37 = vector.extract_strided_slice %34 {offsets = [0, 96], sizes = [2, 32], strides = [1, 1]} : vector<2x128xf32> to vector<2x32xf32>
    %38 = vector.extract_strided_slice %29 {offsets = [0, 64], sizes = [2, 32], strides = [1, 1]} : vector<2x128xf32> to vector<2x32xf32>
    %39 = math.tanh %38 : vector<2x32xf32>
    %40 = arith.mulf %36, %18 : vector<2x32xf32>
    %41 = arith.mulf %35, %39 : vector<2x32xf32>
    %42 = arith.addf %40, %41 : vector<2x32xf32>
    %43 = math.tanh %42 : vector<2x32xf32>
    %44 = arith.mulf %37, %43 : vector<2x32xf32>
    %c2 = arith.constant 2 : index
    %c0_14 = arith.constant 0 : index
    %c0_15 = arith.constant 0 : index
    %45 = vector.load %arg0[%c2, %c0_14, %c0_15] : memref<8x2x4xf32, #tpu.memory_space<vmem>>, vector<1x2x4xf32>
    %46 = vector.shape_cast %45 : vector<1x2x4xf32> to vector<2x4xf32>
    %cst_16 = arith.constant dense<0.000000e+00> : vector<2x256xf32>
    %47 = tpu.matmul %46, %0, %cst_16 {dimension_numbers = #tpu.dot_dimension_numbers<[1], [0], [0], [1], [0, 0, 1, 1], [], []>} : vector<2x4xf32>, vector<4x256xf32>, vector<2x256xf32> -> vector<2x256xf32>
    %48 = vector.broadcast %1 : vector<1x256xf32> to vector<2x256xf32>
    %49 = arith.addf %47, %48 : vector<2x256xf32>
    %50 = vector.extract_strided_slice %49 {offsets = [0, 0], sizes = [2, 128], strides = [1, 1]} : vector<2x256xf32> to vector<2x128xf32>
    %51 = arith.truncf %44 : vector<2x32xf32> to vector<2x32xbf16>
    %cst_17 = arith.constant dense<0.000000e+00> : vector<2x128xf32>
    %52 = tpu.matmul %51, %2, %cst_17 {dimension_numbers = #tpu.dot_dimension_numbers<[1], [0], [0], [1], [0, 0, 1, 1], [], []>} : vector<2x32xbf16>, vector<32x128xbf16>, vector<2x128xf32> -> vector<2x128xf32>
    %53 = arith.addf %50, %52 : vector<2x128xf32>
    %54 = arith.negf %53 : vector<2x128xf32>
    %55 = math.exp %54 : vector<2x128xf32>
    %cst_18 = arith.constant 1.000000e+00 : f32
    %56 = vector.broadcast %cst_18 : f32 to vector<2x128xf32>
    %57 = arith.addf %56, %55 : vector<2x128xf32>
    %58 = arith.divf %56, %57 : vector<2x128xf32>
    %59 = vector.extract_strided_slice %58 {offsets = [0, 0], sizes = [2, 32], strides = [1, 1]} : vector<2x128xf32> to vector<2x32xf32>
    %60 = vector.extract_strided_slice %58 {offsets = [0, 32], sizes = [2, 32], strides = [1, 1]} : vector<2x128xf32> to vector<2x32xf32>
    %61 = vector.extract_strided_slice %58 {offsets = [0, 96], sizes = [2, 32], strides = [1, 1]} : vector<2x128xf32> to vector<2x32xf32>
    %62 = vector.extract_strided_slice %53 {offsets = [0, 64], sizes = [2, 32], strides = [1, 1]} : vector<2x128xf32> to vector<2x32xf32>
    %63 = math.tanh %62 : vector<2x32xf32>
    %64 = arith.mulf %60, %42 : vector<2x32xf32>
    %65 = arith.mulf %59, %63 : vector<2x32xf32>
    %66 = arith.addf %64, %65 : vector<2x32xf32>
    %67 = math.tanh %66 : vector<2x32xf32>
    %68 = arith.mulf %61, %67 : vector<2x32xf32>
    %c3 = arith.constant 3 : index
    %c0_19 = arith.constant 0 : index
    %c0_20 = arith.constant 0 : index
    %69 = vector.load %arg0[%c3, %c0_19, %c0_20] : memref<8x2x4xf32, #tpu.memory_space<vmem>>, vector<1x2x4xf32>
    %70 = vector.shape_cast %69 : vector<1x2x4xf32> to vector<2x4xf32>
    %cst_21 = arith.constant dense<0.000000e+00> : vector<2x256xf32>
    %71 = tpu.matmul %70, %0, %cst_21 {dimension_numbers = #tpu.dot_dimension_numbers<[1], [0], [0], [1], [0, 0, 1, 1], [], []>} : vector<2x4xf32>, vector<4x256xf32>, vector<2x256xf32> -> vector<2x256xf32>
    %72 = vector.broadcast %1 : vector<1x256xf32> to vector<2x256xf32>
    %73 = arith.addf %71, %72 : vector<2x256xf32>
    %74 = vector.extract_strided_slice %73 {offsets = [0, 0], sizes = [2, 128], strides = [1, 1]} : vector<2x256xf32> to vector<2x128xf32>
    %75 = arith.truncf %68 : vector<2x32xf32> to vector<2x32xbf16>
    %cst_22 = arith.constant dense<0.000000e+00> : vector<2x128xf32>
    %76 = tpu.matmul %75, %2, %cst_22 {dimension_numbers = #tpu.dot_dimension_numbers<[1], [0], [0], [1], [0, 0, 1, 1], [], []>} : vector<2x32xbf16>, vector<32x128xbf16>, vector<2x128xf32> -> vector<2x128xf32>
    %77 = arith.addf %74, %76 : vector<2x128xf32>
    %78 = arith.negf %77 : vector<2x128xf32>
    %79 = math.exp %78 : vector<2x128xf32>
    %cst_23 = arith.constant 1.000000e+00 : f32
    %80 = vector.broadcast %cst_23 : f32 to vector<2x128xf32>
    %81 = arith.addf %80, %79 : vector<2x128xf32>
    %82 = arith.divf %80, %81 : vector<2x128xf32>
    %83 = vector.extract_strided_slice %82 {offsets = [0, 0], sizes = [2, 32], strides = [1, 1]} : vector<2x128xf32> to vector<2x32xf32>
    %84 = vector.extract_strided_slice %82 {offsets = [0, 32], sizes = [2, 32], strides = [1, 1]} : vector<2x128xf32> to vector<2x32xf32>
    %85 = vector.extract_strided_slice %82 {offsets = [0, 96], sizes = [2, 32], strides = [1, 1]} : vector<2x128xf32> to vector<2x32xf32>
    %86 = vector.extract_strided_slice %77 {offsets = [0, 64], sizes = [2, 32], strides = [1, 1]} : vector<2x128xf32> to vector<2x32xf32>
    %87 = math.tanh %86 : vector<2x32xf32>
    %88 = arith.mulf %84, %66 : vector<2x32xf32>
    %89 = arith.mulf %83, %87 : vector<2x32xf32>
    %90 = arith.addf %88, %89 : vector<2x32xf32>
    %91 = math.tanh %90 : vector<2x32xf32>
    %92 = arith.mulf %85, %91 : vector<2x32xf32>
    %c4 = arith.constant 4 : index
    %c0_24 = arith.constant 0 : index
    %c0_25 = arith.constant 0 : index
    %93 = vector.load %arg0[%c4, %c0_24, %c0_25] : memref<8x2x4xf32, #tpu.memory_space<vmem>>, vector<1x2x4xf32>
    %94 = vector.shape_cast %93 : vector<1x2x4xf32> to vector<2x4xf32>
    %cst_26 = arith.constant dense<0.000000e+00> : vector<2x256xf32>
    %95 = tpu.matmul %94, %0, %cst_26 {dimension_numbers = #tpu.dot_dimension_numbers<[1], [0], [0], [1], [0, 0, 1, 1], [], []>} : vector<2x4xf32>, vector<4x256xf32>, vector<2x256xf32> -> vector<2x256xf32>
    %96 = vector.broadcast %1 : vector<1x256xf32> to vector<2x256xf32>
    %97 = arith.addf %95, %96 : vector<2x256xf32>
    %98 = vector.extract_strided_slice %97 {offsets = [0, 0], sizes = [2, 128], strides = [1, 1]} : vector<2x256xf32> to vector<2x128xf32>
    %99 = arith.truncf %92 : vector<2x32xf32> to vector<2x32xbf16>
    %cst_27 = arith.constant dense<0.000000e+00> : vector<2x128xf32>
    %100 = tpu.matmul %99, %2, %cst_27 {dimension_numbers = #tpu.dot_dimension_numbers<[1], [0], [0], [1], [0, 0, 1, 1], [], []>} : vector<2x32xbf16>, vector<32x128xbf16>, vector<2x128xf32> -> vector<2x128xf32>
    %101 = arith.addf %98, %100 : vector<2x128xf32>
    %102 = arith.negf %101 : vector<2x128xf32>
    %103 = math.exp %102 : vector<2x128xf32>
    %cst_28 = arith.constant 1.000000e+00 : f32
    %104 = vector.broadcast %cst_28 : f32 to vector<2x128xf32>
    %105 = arith.addf %104, %103 : vector<2x128xf32>
    %106 = arith.divf %104, %105 : vector<2x128xf32>
    %107 = vector.extract_strided_slice %106 {offsets = [0, 0], sizes = [2, 32], strides = [1, 1]} : vector<2x128xf32> to vector<2x32xf32>
    %108 = vector.extract_strided_slice %106 {offsets = [0, 32], sizes = [2, 32], strides = [1, 1]} : vector<2x128xf32> to vector<2x32xf32>
    %109 = vector.extract_strided_slice %106 {offsets = [0, 96], sizes = [2, 32], strides = [1, 1]} : vector<2x128xf32> to vector<2x32xf32>
    %110 = vector.extract_strided_slice %101 {offsets = [0, 64], sizes = [2, 32], strides = [1, 1]} : vector<2x128xf32> to vector<2x32xf32>
    %111 = math.tanh %110 : vector<2x32xf32>
    %112 = arith.mulf %108, %90 : vector<2x32xf32>
    %113 = arith.mulf %107, %111 : vector<2x32xf32>
    %114 = arith.addf %112, %113 : vector<2x32xf32>
    %115 = math.tanh %114 : vector<2x32xf32>
    %116 = arith.mulf %109, %115 : vector<2x32xf32>
    %c5 = arith.constant 5 : index
    %c0_29 = arith.constant 0 : index
    %c0_30 = arith.constant 0 : index
    %117 = vector.load %arg0[%c5, %c0_29, %c0_30] : memref<8x2x4xf32, #tpu.memory_space<vmem>>, vector<1x2x4xf32>
    %118 = vector.shape_cast %117 : vector<1x2x4xf32> to vector<2x4xf32>
    %cst_31 = arith.constant dense<0.000000e+00> : vector<2x256xf32>
    %119 = tpu.matmul %118, %0, %cst_31 {dimension_numbers = #tpu.dot_dimension_numbers<[1], [0], [0], [1], [0, 0, 1, 1], [], []>} : vector<2x4xf32>, vector<4x256xf32>, vector<2x256xf32> -> vector<2x256xf32>
    %120 = vector.broadcast %1 : vector<1x256xf32> to vector<2x256xf32>
    %121 = arith.addf %119, %120 : vector<2x256xf32>
    %122 = vector.extract_strided_slice %121 {offsets = [0, 0], sizes = [2, 128], strides = [1, 1]} : vector<2x256xf32> to vector<2x128xf32>
    %123 = arith.truncf %116 : vector<2x32xf32> to vector<2x32xbf16>
    %cst_32 = arith.constant dense<0.000000e+00> : vector<2x128xf32>
    %124 = tpu.matmul %123, %2, %cst_32 {dimension_numbers = #tpu.dot_dimension_numbers<[1], [0], [0], [1], [0, 0, 1, 1], [], []>} : vector<2x32xbf16>, vector<32x128xbf16>, vector<2x128xf32> -> vector<2x128xf32>
    %125 = arith.addf %122, %124 : vector<2x128xf32>
    %126 = arith.negf %125 : vector<2x128xf32>
    %127 = math.exp %126 : vector<2x128xf32>
    %cst_33 = arith.constant 1.000000e+00 : f32
    %128 = vector.broadcast %cst_33 : f32 to vector<2x128xf32>
    %129 = arith.addf %128, %127 : vector<2x128xf32>
    %130 = arith.divf %128, %129 : vector<2x128xf32>
    %131 = vector.extract_strided_slice %130 {offsets = [0, 0], sizes = [2, 32], strides = [1, 1]} : vector<2x128xf32> to vector<2x32xf32>
    %132 = vector.extract_strided_slice %130 {offsets = [0, 32], sizes = [2, 32], strides = [1, 1]} : vector<2x128xf32> to vector<2x32xf32>
    %133 = vector.extract_strided_slice %130 {offsets = [0, 96], sizes = [2, 32], strides = [1, 1]} : vector<2x128xf32> to vector<2x32xf32>
    %134 = vector.extract_strided_slice %125 {offsets = [0, 64], sizes = [2, 32], strides = [1, 1]} : vector<2x128xf32> to vector<2x32xf32>
    %135 = math.tanh %134 : vector<2x32xf32>
    %136 = arith.mulf %132, %114 : vector<2x32xf32>
    %137 = arith.mulf %131, %135 : vector<2x32xf32>
    %138 = arith.addf %136, %137 : vector<2x32xf32>
    %139 = math.tanh %138 : vector<2x32xf32>
    %140 = arith.mulf %133, %139 : vector<2x32xf32>
    %c6 = arith.constant 6 : index
    %c0_34 = arith.constant 0 : index
    %c0_35 = arith.constant 0 : index
    %141 = vector.load %arg0[%c6, %c0_34, %c0_35] : memref<8x2x4xf32, #tpu.memory_space<vmem>>, vector<1x2x4xf32>
    %142 = vector.shape_cast %141 : vector<1x2x4xf32> to vector<2x4xf32>
    %cst_36 = arith.constant dense<0.000000e+00> : vector<2x256xf32>
    %143 = tpu.matmul %142, %0, %cst_36 {dimension_numbers = #tpu.dot_dimension_numbers<[1], [0], [0], [1], [0, 0, 1, 1], [], []>} : vector<2x4xf32>, vector<4x256xf32>, vector<2x256xf32> -> vector<2x256xf32>
    %144 = vector.broadcast %1 : vector<1x256xf32> to vector<2x256xf32>
    %145 = arith.addf %143, %144 : vector<2x256xf32>
    %146 = vector.extract_strided_slice %145 {offsets = [0, 0], sizes = [2, 128], strides = [1, 1]} : vector<2x256xf32> to vector<2x128xf32>
    %147 = arith.truncf %140 : vector<2x32xf32> to vector<2x32xbf16>
    %cst_37 = arith.constant dense<0.000000e+00> : vector<2x128xf32>
    %148 = tpu.matmul %147, %2, %cst_37 {dimension_numbers = #tpu.dot_dimension_numbers<[1], [0], [0], [1], [0, 0, 1, 1], [], []>} : vector<2x32xbf16>, vector<32x128xbf16>, vector<2x128xf32> -> vector<2x128xf32>
    %149 = arith.addf %146, %148 : vector<2x128xf32>
    %150 = arith.negf %149 : vector<2x128xf32>
    %151 = math.exp %150 : vector<2x128xf32>
    %cst_38 = arith.constant 1.000000e+00 : f32
    %152 = vector.broadcast %cst_38 : f32 to vector<2x128xf32>
    %153 = arith.addf %152, %151 : vector<2x128xf32>
    %154 = arith.divf %152, %153 : vector<2x128xf32>
    %155 = vector.extract_strided_slice %154 {offsets = [0, 0], sizes = [2, 32], strides = [1, 1]} : vector<2x128xf32> to vector<2x32xf32>
    %156 = vector.extract_strided_slice %154 {offsets = [0, 32], sizes = [2, 32], strides = [1, 1]} : vector<2x128xf32> to vector<2x32xf32>
    %157 = vector.extract_strided_slice %154 {offsets = [0, 96], sizes = [2, 32], strides = [1, 1]} : vector<2x128xf32> to vector<2x32xf32>
    %158 = vector.extract_strided_slice %149 {offsets = [0, 64], sizes = [2, 32], strides = [1, 1]} : vector<2x128xf32> to vector<2x32xf32>
    %159 = math.tanh %158 : vector<2x32xf32>
    %160 = arith.mulf %156, %138 : vector<2x32xf32>
    %161 = arith.mulf %155, %159 : vector<2x32xf32>
    %162 = arith.addf %160, %161 : vector<2x32xf32>
    %163 = math.tanh %162 : vector<2x32xf32>
    %164 = arith.mulf %157, %163 : vector<2x32xf32>
    %c7 = arith.constant 7 : index
    %c0_39 = arith.constant 0 : index
    %c0_40 = arith.constant 0 : index
    %165 = vector.load %arg0[%c7, %c0_39, %c0_40] : memref<8x2x4xf32, #tpu.memory_space<vmem>>, vector<1x2x4xf32>
    %166 = vector.shape_cast %165 : vector<1x2x4xf32> to vector<2x4xf32>
    %cst_41 = arith.constant dense<0.000000e+00> : vector<2x256xf32>
    %167 = tpu.matmul %166, %0, %cst_41 {dimension_numbers = #tpu.dot_dimension_numbers<[1], [0], [0], [1], [0, 0, 1, 1], [], []>} : vector<2x4xf32>, vector<4x256xf32>, vector<2x256xf32> -> vector<2x256xf32>
    %168 = vector.broadcast %1 : vector<1x256xf32> to vector<2x256xf32>
    %169 = arith.addf %167, %168 : vector<2x256xf32>
    %170 = vector.extract_strided_slice %169 {offsets = [0, 0], sizes = [2, 128], strides = [1, 1]} : vector<2x256xf32> to vector<2x128xf32>
    %171 = arith.truncf %164 : vector<2x32xf32> to vector<2x32xbf16>
    %cst_42 = arith.constant dense<0.000000e+00> : vector<2x128xf32>
    %172 = tpu.matmul %171, %2, %cst_42 {dimension_numbers = #tpu.dot_dimension_numbers<[1], [0], [0], [1], [0, 0, 1, 1], [], []>} : vector<2x32xbf16>, vector<32x128xbf16>, vector<2x128xf32> -> vector<2x128xf32>
    %173 = arith.addf %170, %172 : vector<2x128xf32>
    %174 = arith.negf %173 : vector<2x128xf32>
    %175 = math.exp %174 : vector<2x128xf32>
    %cst_43 = arith.constant 1.000000e+00 : f32
    %176 = vector.broadcast %cst_43 : f32 to vector<2x128xf32>
    %177 = arith.addf %176, %175 : vector<2x128xf32>
    %178 = arith.divf %176, %177 : vector<2x128xf32>
    %179 = vector.extract_strided_slice %178 {offsets = [0, 0], sizes = [2, 32], strides = [1, 1]} : vector<2x128xf32> to vector<2x32xf32>
    %180 = vector.extract_strided_slice %178 {offsets = [0, 32], sizes = [2, 32], strides = [1, 1]} : vector<2x128xf32> to vector<2x32xf32>
    %181 = vector.extract_strided_slice %178 {offsets = [0, 96], sizes = [2, 32], strides = [1, 1]} : vector<2x128xf32> to vector<2x32xf32>
    %182 = vector.extract_strided_slice %173 {offsets = [0, 64], sizes = [2, 32], strides = [1, 1]} : vector<2x128xf32> to vector<2x32xf32>
    %183 = math.tanh %182 : vector<2x32xf32>
    %184 = arith.mulf %180, %162 : vector<2x32xf32>
    %185 = arith.mulf %179, %183 : vector<2x32xf32>
    %186 = arith.addf %184, %185 : vector<2x32xf32>
    %187 = math.tanh %186 : vector<2x32xf32>
    %188 = arith.mulf %181, %187 : vector<2x32xf32>
    %189 = vector.extract_strided_slice %169 {offsets = [0, 128], sizes = [2, 128], strides = [1, 1]} : vector<2x256xf32> to vector<2x128xf32>
    %190 = arith.negf %189 : vector<2x128xf32>
    %191 = math.exp %190 : vector<2x128xf32>
    %cst_44 = arith.constant 1.000000e+00 : f32
    %192 = vector.broadcast %cst_44 : f32 to vector<2x128xf32>
    %193 = arith.addf %192, %191 : vector<2x128xf32>
    %194 = arith.divf %192, %193 : vector<2x128xf32>
    %195 = vector.extract_strided_slice %194 {offsets = [0, 0], sizes = [2, 32], strides = [1, 1]} : vector<2x128xf32> to vector<2x32xf32>
    %196 = vector.extract_strided_slice %194 {offsets = [0, 96], sizes = [2, 32], strides = [1, 1]} : vector<2x128xf32> to vector<2x32xf32>
    %197 = vector.extract_strided_slice %189 {offsets = [0, 64], sizes = [2, 32], strides = [1, 1]} : vector<2x128xf32> to vector<2x32xf32>
    %198 = math.tanh %197 : vector<2x32xf32>
    %199 = arith.mulf %195, %198 : vector<2x32xf32>
    %200 = math.tanh %199 : vector<2x32xf32>
    %201 = arith.mulf %196, %200 : vector<2x32xf32>
    %c0_45 = arith.constant 0 : index
    %c0_46 = arith.constant 0 : index
    %202 = vector.load %arg4[%c0_45, %c0_46] : memref<32x32xf32, #tpu.memory_space<vmem>>, vector<32x32xf32>
    %cst_47 = arith.constant dense<0.000000e+00> : vector<2x32xf32>
    %203 = tpu.matmul %188, %202, %cst_47 {dimension_numbers = #tpu.dot_dimension_numbers<[1], [0], [0], [1], [0, 0, 1, 1], [], []>} : vector<2x32xf32>, vector<32x32xf32>, vector<2x32xf32> -> vector<2x32xf32>
    %c0_48 = arith.constant 0 : index
    %c0_49 = arith.constant 0 : index
    %204 = vector.load %arg5[%c0_48, %c0_49] : memref<32x32xf32, #tpu.memory_space<vmem>>, vector<32x32xf32>
    %cst_50 = arith.constant dense<0.000000e+00> : vector<2x32xf32>
    %205 = tpu.matmul %201, %204, %cst_50 {dimension_numbers = #tpu.dot_dimension_numbers<[1], [0], [0], [1], [0, 0, 1, 1], [], []>} : vector<2x32xf32>, vector<32x32xf32>, vector<2x32xf32> -> vector<2x32xf32>
    %206 = arith.addf %203, %205 : vector<2x32xf32>
    %c0_51 = arith.constant 0 : index
    %c0_52 = arith.constant 0 : index
    %207 = vector.load %arg6[%c0_51, %c0_52] : memref<1x32xf32, #tpu.memory_space<vmem>>, vector<1x32xf32>
    %208 = vector.broadcast %207 : vector<1x32xf32> to vector<2x32xf32>
    %209 = arith.addf %206, %208 : vector<2x32xf32>
    %cst_53 = arith.constant 0.000000e+00 : f32
    %210 = vector.broadcast %cst_53 : f32 to vector<2x32xf32>
    %211 = arith.maximumf %209, %210 : vector<2x32xf32>
    %c0_54 = arith.constant 0 : index
    %c0_55 = arith.constant 0 : index
    %212 = vector.load %arg7[%c0_54, %c0_55] : memref<32x3xf32, #tpu.memory_space<vmem>>, vector<32x3xf32>
    %cst_56 = arith.constant dense<0.000000e+00> : vector<2x3xf32>
    %213 = tpu.matmul %211, %212, %cst_56 {dimension_numbers = #tpu.dot_dimension_numbers<[1], [0], [0], [1], [0, 0, 1, 1], [], []>} : vector<2x32xf32>, vector<32x3xf32>, vector<2x3xf32> -> vector<2x3xf32>
    %c0_57 = arith.constant 0 : index
    %c0_58 = arith.constant 0 : index
    %214 = vector.load %arg8[%c0_57, %c0_58] : memref<1x3xf32, #tpu.memory_space<vmem>>, vector<1x3xf32>
    %215 = vector.broadcast %214 : vector<1x3xf32> to vector<2x3xf32>
    %216 = arith.addf %213, %215 : vector<2x3xf32>
    %cst_59 = arith.constant dense<0xFF800000> : vector<2xf32>
    %217 = vector.multi_reduction <maximumf>, %216, %cst_59 [1] : vector<2x3xf32> to vector<2xf32>
    %218 = vector.shape_cast %217 : vector<2xf32> to vector<2x1xf32>
    %219 = vector.broadcast %218 : vector<2x1xf32> to vector<2x3xf32>
    %220 = arith.subf %216, %219 : vector<2x3xf32>
    %221 = math.exp %220 : vector<2x3xf32>
    %cst_60 = arith.constant dense<0.000000e+00> : vector<2xf32>
    %222 = vector.multi_reduction <add>, %221, %cst_60 [1] : vector<2x3xf32> to vector<2xf32>
    %223 = vector.shape_cast %222 : vector<2xf32> to vector<2x1xf32>
    %224 = tpu.reciprocal %223 {approx = true} : vector<2x1xf32> -> vector<2x1xf32>
    %225 = vector.broadcast %224 : vector<2x1xf32> to vector<2x3xf32>
    %226 = arith.mulf %221, %225 : vector<2x3xf32>
    %c0_61 = arith.constant 0 : index
    %c0_62 = arith.constant 0 : index
    %227 = vector.load %arg9[%c0_61, %c0_62] : memref<2x3xf32, #tpu.memory_space<vmem>>, vector<2x3xf32>
    tpu.vector_store %arg9[%c0_61, %c0_62], %226 {strides = array<i32>} : memref<2x3xf32, #tpu.memory_space<vmem>>, vector<2x3xf32>,
    return
  }
}

</mosaic_0001>

<llo_original>
// kernel: bilstm_classifier_forward.1
$region0: #{bilstm_classifier_forward.1}
  #allocation0 [shape = 'u32[]', space=smem, size = 0x4, offset = 0x4, fixed_abs, tag = 'smem constant byte address 0x4 - core index']
  #allocation1 [shape = 'u32[144,128]{1,0:T(1,128)}', space=vmem, size = 0x12000, scoped, tag = 'internal scratch']
  %s0 = inlined_call_operand.vmem [shape: f32[8,2,4], index: 0, kind: input, shape index: {}]
  %s1 = inlined_call_operand.vmem [shape: f32[4,256], index: 1, kind: input, shape index: {}]
  %s2 = inlined_call_operand.vmem [shape: f32[1,256], index: 2, kind: input, shape index: {}]
  %s3 = inlined_call_operand.vmem [shape: bf16[32,128], index: 3, kind: input, shape index: {}]
  %s4 = inlined_call_operand.vmem [shape: f32[32,32], index: 4, kind: input, shape index: {}]
  %s5 = inlined_call_operand.vmem [shape: f32[32,32], index: 5, kind: input, shape index: {}]
  %s6 = inlined_call_operand.hbm [shape: f32[1,32], index: 6, kind: input, shape index: {}]
  %s7 = inlined_call_operand.vmem [shape: f32[32,3], index: 7, kind: input, shape index: {}]
  %s8 = inlined_call_operand.hbm [shape: f32[1,3], index: 8, kind: input, shape index: {}]
  %s9 = inlined_call_operand.hbm [shape: f32[2,3], index: 9, kind: output, shape index: {}]
  %s10 = sld [smem:[#allocation0]]
  $region54: #{bilstm_classifier_forward.1} parent=0
    _
  %s12 = ssub.s32 1, %s10
  %s13 = scalar_select 0, %s12, %s10
  $region1: #{bilstm_classifier_forward.1} parent=0
    #allocation2 [shape = 'u8[512]{0}', space=vmem, size = 0x400, scoped, tag = 'input window, operand 6, single buffered']
    #allocation3 [shape = 's32[1]{0}', space=sflag, size = 0x4, scoped, tag = 'scoped memory for bilstm_classifier_forward.1']
    #allocation4 [shape = 's32[1]{0}', space=sflag, size = 0x4, scoped, tag = 'scoped memory for bilstm_classifier_forward.1']
    #allocation5 [shape = 'u8[512]{0}', space=vmem, size = 0x400, scoped, tag = 'input window, operand 8, single buffered']
    #allocation6 [shape = 's32[1]{0}', space=sflag, size = 0x4, scoped, tag = 'scoped memory for bilstm_classifier_forward.1']
    #allocation7 [shape = 'u8[1024]{0}', space=vmem, size = 0x400, scoped, tag = 'output window, operand 0, single buffered']
    %14 = vsyncpa [#allocation3], 0
    %15 = vsyncpa [#allocation6], 0
    %16 = vsyncpa [#allocation4], 0
    // Predicated region
    $region2: #{bilstm_classifier_forward.1} parent=1 // pred_check
      _
    $region3: #{bilstm_classifier_forward.1} parent=1 // pred_check_branch
      %18 = sbr.rel (0) target = $region5
    $region4: #{bilstm_classifier_forward.1} parent=1 // pred_region
      _
    $region5: #{bilstm_classifier_forward.1} parent=1 // pred_fallthru
      _
    // Predicated region
    $region6: #{bilstm_classifier_forward.1} parent=1 // pred_check
      _
    $region7: #{bilstm_classifier_forward.1} parent=1 // pred_check_branch
      %20 = sbr.rel (0) target = $region9
    $region8: #{bilstm_classifier_forward.1} parent=1 // pred_region
      _
    $region9: #{bilstm_classifier_forward.1} parent=1 // pred_fallthru
      _
    // Predicated region
    $region10: #{bilstm_classifier_forward.1} parent=1 // pred_check
      _
    $region11: #{bilstm_classifier_forward.1} parent=1 // pred_check_branch
      %22 = sbr.rel (0) target = $region13
    $region12: #{bilstm_classifier_forward.1} parent=1 // pred_region
      _
    $region13: #{bilstm_classifier_forward.1} parent=1 // pred_fallthru
      _
    // Predicated region
    $region14: #{bilstm_classifier_forward.1} parent=1 // pred_check
      _
    $region15: #{bilstm_classifier_forward.1} parent=1 // pred_check_branch
      %24 = sbr.rel (0) target = $region17
    $region16: #{bilstm_classifier_forward.1} parent=1 // pred_region
      _
    $region17: #{bilstm_classifier_forward.1} parent=1 // pred_fallthru
      _
    // Predicated region
    $region18: #{bilstm_classifier_forward.1} parent=1 // pred_check
      _
    $region19: #{bilstm_classifier_forward.1} parent=1 // pred_check_branch
      %26 = sbr.rel (0) target = $region21
    $region20: #{bilstm_classifier_forward.1} parent=1 // pred_region
      _
    $region21: #{bilstm_classifier_forward.1} parent=1 // pred_fallthru
      _
    // Predicated region
    $region22: #{bilstm_classifier_forward.1} parent=1 // pred_check
      _
    $region23: #{bilstm_classifier_forward.1} parent=1 // pred_check_branch
      %28 = sbr.rel (0) target = $region25
    $region24: #{bilstm_classifier_forward.1} parent=1 // pred_region
      _
    $region25: #{bilstm_classifier_forward.1} parent=1 // pred_fallthru
      _
    // Predicated region
    $region26: #{bilstm_classifier_forward.1} parent=1 // pred_check
      _
    $region27: #{bilstm_classifier_forward.1} parent=1 // pred_check_branch
      %30 = sbr.rel (0) target = $region29
    $region28: #{bilstm_classifier_forward.1} parent=1 // pred_region
      %s32 = ssub.s32 16, 16
      %33 = vsyncadd [#allocation3], %s32
      %s35 = sshll.u32 [#allocation2], 4
      %s36 = int_to_ptr.vmem [resolvable:$true] %s35
      %38 = dma.hbm_to_vmem [thread:$0]  %s6, 16, %s36, [#allocation3]
    $region29: #{bilstm_classifier_forward.1} parent=1 // pred_fallthru
      _
    // Predicated region
    $region30: #{bilstm_classifier_forward.1} parent=1 // pred_check
      _
    $region31: #{bilstm_classifier_forward.1} parent=1 // pred_check_branch
      %40 = sbr.rel (0) target = $region33
    $region32: #{bilstm_classifier_forward.1} parent=1 // pred_region
      _
    $region33: #{bilstm_classifier_forward.1} parent=1 // pred_fallthru
      _
    // Predicated region
    $region34: #{bilstm_classifier_forward.1} parent=1 // pred_check
      _
    $region35: #{bilstm_classifier_forward.1} parent=1 // pred_check_branch
      %42 = sbr.rel (0) target = $region37
    $region36: #{bilstm_classifier_forward.1} parent=1 // pred_region
      %s44 = ssub.s32 16, 16
      %45 = vsyncadd [#allocation6], %s44
      %s47 = sshll.u32 [#allocation5], 4
      %s48 = int_to_ptr.vmem [resolvable:$true] %s47
      %50 = dma.hbm_to_vmem [thread:$0]  %s8, 16, %s48, [#allocation6]
    $region37: #{bilstm_classifier_forward.1} parent=1 // pred_fallthru
      _
    // Predicated region
    $region38: #{bilstm_classifier_forward.1} parent=1 // pred_check
      _
    $region39: #{bilstm_classifier_forward.1} parent=1 // pred_check_branch
      %52 = sbr.rel (0) target = $region41
    $region40: #{bilstm_classifier_forward.1} parent=1 // pred_region
      %53 = dma.done [#allocation3], 16
    $region41: #{bilstm_classifier_forward.1} parent=1 // pred_fallthru
      _
    // Predicated region
    $region42: #{bilstm_classifier_forward.1} parent=1 // pred_check
      _
    $region43: #{bilstm_classifier_forward.1} parent=1 // pred_check_branch
      %55 = sbr.rel (0) target = $region45
    $region44: #{bilstm_classifier_forward.1} parent=1 // pred_region
      %56 = dma.done [#allocation6], 16
    $region45: #{bilstm_classifier_forward.1} parent=1 // pred_fallthru
      _
    %v58 = vld [vmem:[%s1] sm:$0xff]
    %v59 = vld [vmem:[%s2] sm:$0x3]
    %v60 = vld [vmem:[%s3] sm:$0xf]
    %v61 = vld [vmem:[%s3 + $0x4] sm:$0xf]
    %v62 = vld [vmem:[%s3 + $0x8] sm:$0xf]
    %v63 = vld [vmem:[%s3 + $0xc] sm:$0xf]
    %v64 = vld [vmem:[%s0] sm:$0x3]
    %v66 = vlaneseq
    %v67 = vshrl.u32 %v66, 7
    %v68 = vsub.s32 0, %v67
    %v69 = vrot.slane %v59, %v68
    %v70 = vlaneseq
    %v71 = vshrl.u32 %v70, 7
    %v72 = vsub.s32 1, %v71
    %v73 = vrot.slane %v59, %v72
    %v77 = vcombine.high %v58, %v58
    %vm78 = vcmask 31744
    %v80 = vsel %vm78, %v64, 0
    %vm82 = vcmask 1043456
    %v83 = vsel %vm82, %v58, 0
    %v85 = vsel %vm82, %v77, 0
    %87 = vmatprep.subr.mxu0 %v85
    %88 = vmatpush1.msra.mxu0 %v83
    %89 = vmatprep.subr.mxu0 0.0
    %90 = vmatpush1.msra.mxu0 0.0
    %91 = vmatprep.subr.mxu0 0.0
    %92 = vmatpush1.msra.mxu0 0.0
    %93 = vmatprep.subr.mxu0 0.0
    %94 = vmatpush1.msra.mxu0 0.0
    %95 = vmatprep.subr.mxu0 0.0
    %96 = vmatpush1.msra.mxu0 0.0
    %97 = vmatprep.subr.mxu0 0.0
    %98 = vmatpush1.msra.mxu0 0.0
    %99 = vmatprep.subr.mxu0 0.0
    %100 = vmatpush1.msra.mxu0 0.0
    %101 = vmatprep.subr.mxu0 0.0
    %102 = vmatpush1.msra.mxu0 0.0
    %103 = vmatprep.subr.mxu0 0.0
    %104 = vmatpush1.msra.mxu0 0.0
    %105 = vmatprep.subr.mxu0 0.0
    %106 = vmatpush1.msra.mxu0 0.0
    %107 = vmatprep.subr.mxu0 0.0
    %108 = vmatpush1.msra.mxu0 0.0
    %109 = vmatprep.subr.mxu0 0.0
    %110 = vmatpush1.msra.mxu0 0.0
    %111 = vmatprep.subr.mxu0 0.0
    %112 = vmatpush1.msra.mxu0 0.0
    %113 = vmatprep.subr.mxu0 0.0
    %114 = vmatpush1.msra.mxu0 0.0
    %115 = vmatprep.subr.mxu0 0.0
    %116 = vmatpush1.msra.mxu0 0.0
    %117 = vmatprep.subr.mxu0 0.0
    %118 = vmatpush1.msra.mxu0 0.0
    %119 = vmatprep.subr.mxu0 0.0
    %120 = vmatpush1.msra.mxu0 0.0
    %121 = vmatprep.subr.mxu0 0.0
    %122 = vmatpush1.msra.mxu0 0.0
    %123 = vmatprep.subr.mxu0 0.0
    %124 = vmatpush1.msra.mxu0 0.0
    %125 = vmatprep.subr.mxu0 0.0
    %126 = vmatpush1.msra.mxu0 0.0
    %127 = vmatprep.subr.mxu0 0.0
    %128 = vmatpush1.msra.mxu0 0.0
    %129 = vmatprep.subr.mxu0 0.0
    %130 = vmatpush1.msra.mxu0 0.0
    %131 = vmatprep.subr.mxu0 0.0
    %132 = vmatpush1.msra.mxu0 0.0
    %133 = vmatprep.subr.mxu0 0.0
    %134 = vmatpush1.msra.mxu0 0.0
    %135 = vmatprep.subr.mxu0 0.0
    %136 = vmatpush1.msra.mxu0 0.0
    %137 = vmatprep.subr.mxu0 0.0
    %138 = vmatpush1.msra.mxu0 0.0
    %139 = vmatprep.subr.mxu0 0.0
    %140 = vmatpush1.msra.mxu0 0.0
    %141 = vmatprep.subr.mxu0 0.0
    %142 = vmatpush1.msra.mxu0 0.0
    %143 = vmatprep.subr.mxu0 0.0
    %144 = vmatpush1.msra.mxu0 0.0
    %145 = vmatprep.subr.mxu0 0.0
    %146 = vmatpush1.msra.mxu0 0.0
    %147 = vmatprep.subr.mxu0 0.0
    %148 = vmatpush1.msra.mxu0 0.0
    %149 = vmatprep.subr.mxu0 0.0
    %150 = vmatpush1.msra.mxu0 0.0
    %151 = vmatprep.mubr.f32.mxu0 0.0
    %152 = vmatmul.mubr.f32.gmra.mrb[0].mxu0 %v80
    %v153 = vpop.f32.mrb[0].mxu0
    %v154 = vadd.f32 %v69, %v153
    %v155 = vpop.f32.mrb[0].mxu0
    %156 = vdwg.mxu0
    %v157 = vxor.u32 %v154, 2147483648
    %v158 = vmul.f32 %v157, 1.442695
    %v159 = vpow.pop %v158
    %v160 = vadd.f32 %v159, 1.0
    %v161 = vrcp.pop %v160
    %v162 = vmul.f32 1.0, %v161
    %v163 = vtanh.pop %v154
    %165 = vrot.lane.b32.xlu0 %v163, 64
    %v166 = vpop.permute.xlu0 %165
    %v168 = vmul.f32 %v162, %v166
    %v169 = vtanh.pop %v168
    %171 = vrot.lane.b32.xlu0 %v169, 96
    %v172 = vpop.permute.xlu0 %171
    %v174 = vmul.f32 %v162, %v172
    %s175 = scalar_lea.vmem %s0, 2
    %v176 = vld [vmem:[%s175] sm:$0x3]
    %v178 = vsel %vm78, %v176, 0
    %180 = vmatprep.subr.mxu0 %v85
    %181 = vmatpush1.msra.mxu0 %v83
    %182 = vmatprep.subr.mxu0 0.0
    %183 = vmatpush1.msra.mxu0 0.0
    %184 = vmatprep.subr.mxu0 0.0
    %185 = vmatpush1.msra.mxu0 0.0
    %186 = vmatprep.subr.mxu0 0.0
    %187 = vmatpush1.msra.mxu0 0.0
    %188 = vmatprep.subr.mxu0 0.0
    %189 = vmatpush1.msra.mxu0 0.0
    %190 = vmatprep.subr.mxu0 0.0
    %191 = vmatpush1.msra.mxu0 0.0
    %192 = vmatprep.subr.mxu0 0.0
    %193 = vmatpush1.msra.mxu0 0.0
    %194 = vmatprep.subr.mxu0 0.0
    %195 = vmatpush1.msra.mxu0 0.0
    %196 = vmatprep.subr.mxu0 0.0
    %197 = vmatpush1.msra.mxu0 0.0
    %198 = vmatprep.subr.mxu0 0.0
    %199 = vmatpush1.msra.mxu0 0.0
    %200 = vmatprep.subr.mxu0 0.0
    %201 = vmatpush1.msra.mxu0 0.0
    %202 = vmatprep.subr.mxu0 0.0
    %203 = vmatpush1.msra.mxu0 0.0
    %204 = vmatprep.subr.mxu0 0.0
    %205 = vmatpush1.msra.mxu0 0.0
    %206 = vmatprep.subr.mxu0 0.0
    %207 = vmatpush1.msra.mxu0 0.0
    %208 = vmatprep.subr.mxu0 0.0
    %209 = vmatpush1.msra.mxu0 0.0
    %210 = vmatprep.subr.mxu0 0.0
    %211 = vmatpush1.msra.mxu0 0.0
    %212 = vmatprep.subr.mxu0 0.0
    %213 = vmatpush1.msra.mxu0 0.0
    %214 = vmatprep.subr.mxu0 0.0
    %215 = vmatpush1.msra.mxu0 0.0
    %216 = vmatprep.subr.mxu0 0.0
    %217 = vmatpush1.msra.mxu0 0.0
    %218 = vmatprep.subr.mxu0 0.0
    %219 = vmatpush1.msra.mxu0 0.0
    %220 = vmatprep.subr.mxu0 0.0
    %221 = vmatpush1.msra.mxu0 0.0
    %222 = vmatprep.subr.mxu0 0.0
    %223 = vmatpush1.msra.mxu0 0.0
    %224 = vmatprep.subr.mxu0 0.0
    %225 = vmatpush1.msra.mxu0 0.0
    %226 = vmatprep.subr.mxu0 0.0
    %227 = vmatpush1.msra.mxu0 0.0
    %228 = vmatprep.subr.mxu0 0.0
    %229 = vmatpush1.msra.mxu0 0.0
    %230 = vmatprep.subr.mxu0 0.0
    %231 = vmatpush1.msra.mxu0 0.0
    %232 = vmatprep.subr.mxu0 0.0
    %233 = vmatpush1.msra.mxu0 0.0
    %234 = vmatprep.subr.mxu0 0.0
    %235 = vmatpush1.msra.mxu0 0.0
    %236 = vmatprep.subr.mxu0 0.0
    %237 = vmatpush1.msra.mxu0 0.0
    %238 = vmatprep.subr.mxu0 0.0
    %239 = vmatpush1.msra.mxu0 0.0
    %240 = vmatprep.subr.mxu0 0.0
    %241 = vmatpush1.msra.mxu0 0.0
    %242 = vmatprep.subr.mxu0 0.0
    %243 = vmatpush1.msra.mxu0 0.0
    %244 = vmatprep.mubr.f32.mxu0 0.0
    %245 = vmatmul.mubr.f32.gmra.mrb[0].mxu0 %v178
    %v246 = vpop.f32.mrb[0].mxu0
    %v247 = vadd.f32 %v69, %v246
    %v248 = vpop.f32.mrb[0].mxu0
    %249 = vdwg.mxu0
    %v250 = vpack.c.bf16 %v174, %v174
    %252 = vrot.lane.b32.xlu0 %v250, 32
    %v253 = vpop.permute.xlu0 %252
    %v258 = vunpack.c.l.b16 %v60
    %v259 = vunpack.c.l.b16 %v61
    %v260 = vunpack.c.l.b16 %v62
    %v261 = vunpack.c.l.b16 %v63
    %v262 = vpack.c.b16 %v259, %v258
    %v263 = vpack.c.b16 %v261, %v260
    %vm266 = vcmask 261120
    %v268 = vsel %vm266, %v253, 0
    %270 = vmatprep.subr.bf16.mxu0 0
    %271 = vmatpush1.bf16.msra.mxu0 %v262
    %272 = vmatprep.subr.bf16.mxu0 0
    %273 = vmatpush1.bf16.msra.mxu0 %v263
    %274 = vmatprep.subr.bf16.mxu0 0
    %275 = vmatpush1.bf16.msra.mxu0 0
    %276 = vmatprep.subr.bf16.mxu0 0
    %277 = vmatpush1.bf16.msra.mxu0 0
    %278 = vmatprep.subr.bf16.mxu0 0
    %279 = vmatpush1.bf16.msra.mxu0 0
    %280 = vmatprep.subr.bf16.mxu0 0
    %281 = vmatpush1.bf16.msra.mxu0 0
    %282 = vmatprep.subr.bf16.mxu0 0
    %283 = vmatpush1.bf16.msra.mxu0 0
    %284 = vmatprep.subr.bf16.mxu0 0
    %285 = vmatpush1.bf16.msra.mxu0 0
    %286 = vmatprep.subr.bf16.mxu0 0
    %287 = vmatpush1.bf16.msra.mxu0 0
    %288 = vmatprep.subr.bf16.mxu0 0
    %289 = vmatpush1.bf16.msra.mxu0 0
    %290 = vmatprep.subr.bf16.mxu0 0
    %291 = vmatpush1.bf16.msra.mxu0 0
    %292 = vmatprep.subr.bf16.mxu0 0
    %293 = vmatpush1.bf16.msra.mxu0 0
    %294 = vmatprep.subr.bf16.mxu0 0
    %295 = vmatpush1.bf16.msra.mxu0 0
    %296 = vmatprep.subr.bf16.mxu0 0
    %297 = vmatpush1.bf16.msra.mxu0 0
    %298 = vmatprep.subr.bf16.mxu0 0
    %299 = vmatpush1.bf16.msra.mxu0 0
    %300 = vmatprep.subr.bf16.mxu0 0
    %301 = vmatpush1.bf16.msra.mxu0 0
    %302 = vmatprep.mubr.bf16.mxu0 0
    %303 = vmatmul.mubr.bf16.gmra.mrb[0].mxu0 %v268
    %v304 = vpop.f32.mrb[0].mxu0
    %v305 = vadd.f32 0.0, %v304
    %v306 = vpop.f32.mrb[0].mxu0
    %v307 = vpop.f32.mrb[0].mxu0
    %v308 = vpop.f32.mrb[0].mxu0
    %309 = vdwg.mxu0
    %v310 = vadd.f32 %v247, %v305
    %v311 = vxor.u32 %v310, 2147483648
    %v312 = vmul.f32 %v311, 1.442695
    %v313 = vpow.pop %v312
    %v314 = vadd.f32 %v313, 1.0
    %v315 = vrcp.pop %v314
    %v316 = vmul.f32 1.0, %v315
    %v317 = vtanh.pop %v310
    %319 = vrot.lane.b32.xlu0 %v168, 32
    %v320 = vpop.permute.xlu0 %319
    %v322 = vmul.f32 %v316, %v320
    %324 = vrot.lane.b32.xlu0 %v317, 64
    %v325 = vpop.permute.xlu0 %324
    %v327 = vmul.f32 %v316, %v325
    %329 = vrot.lane.b32.xlu0 %v327, 32
    %v330 = vpop.permute.xlu0 %329
    %v332 = vadd.f32 %v322, %v330
    %v333 = vtanh.pop %v332
    %335 = vrot.lane.b32.xlu0 %v333, 64
    %v336 = vpop.permute.xlu0 %335
    %v338 = vmul.f32 %v316, %v336
    %s339 = scalar_lea.vmem %s0, 4
    %v340 = vld [vmem:[%s339] sm:$0x3]
    %v342 = vsel %vm78, %v340, 0
    %344 = vmatprep.subr.mxu0 %v85
    %345 = vmatpush1.msra.mxu0 %v83
    %346 = vmatprep.subr.mxu0 0.0
    %347 = vmatpush1.msra.mxu0 0.0
    %348 = vmatprep.subr.mxu0 0.0
    %349 = vmatpush1.msra.mxu0 0.0
    %350 = vmatprep.subr.mxu0 0.0
    %351 = vmatpush1.msra.mxu0 0.0
    %352 = vmatprep.subr.mxu0 0.0
    %353 = vmatpush1.msra.mxu0 0.0
    %354 = vmatprep.subr.mxu0 0.0
    %355 = vmatpush1.msra.mxu0 0.0
    %356 = vmatprep.subr.mxu0 0.0
    %357 = vmatpush1.msra.mxu0 0.0
    %358 = vmatprep.subr.mxu0 0.0
    %359 = vmatpush1.msra.mxu0 0.0
    %360 = vmatprep.subr.mxu0 0.0
    %361 = vmatpush1.msra.mxu0 0.0
    %362 = vmatprep.subr.mxu0 0.0
    %363 = vmatpush1.msra.mxu0 0.0
    %364 = vmatprep.subr.mxu0 0.0
    %365 = vmatpush1.msra.mxu0 0.0
    %366 = vmatprep.subr.mxu0 0.0
    %367 = vmatpush1.msra.mxu0 0.0
    %368 = vmatprep.subr.mxu0 0.0
    %369 = vmatpush1.msra.mxu0 0.0
    %370 = vmatprep.subr.mxu0 0.0
    %371 = vmatpush1.msra.mxu0 0.0
    %372 = vmatprep.subr.mxu0 0.0
    %373 = vmatpush1.msra.mxu0 0.0
    %374 = vmatprep.subr.mxu0 0.0
    %375 = vmatpush1.msra.mxu0 0.0
    %376 = vmatprep.subr.mxu0 0.0
    %377 = vmatpush1.msra.mxu0 0.0
    %378 = vmatprep.subr.mxu0 0.0
    %379 = vmatpush1.msra.mxu0 0.0
    %380 = vmatprep.subr.mxu0 0.0
    %381 = vmatpush1.msra.mxu0 0.0
    %382 = vmatprep.subr.mxu0 0.0
    %383 = vmatpush1.msra.mxu0 0.0
    %384 = vmatprep.subr.mxu0 0.0
    %385 = vmatpush1.msra.mxu0 0.0
    %386 = vmatprep.subr.mxu0 0.0
    %387 = vmatpush1.msra.mxu0 0.0
    %388 = vmatprep.subr.mxu0 0.0
    %389 = vmatpush1.msra.mxu0 0.0
    %390 = vmatprep.subr.mxu0 0.0
    %391 = vmatpush1.msra.mxu0 0.0
    %392 = vmatprep.subr.mxu0 0.0
    %393 = vmatpush1.msra.mxu0 0.0
    %394 = vmatprep.subr.mxu0 0.0
    %395 = vmatpush1.msra.mxu0 0.0
    %396 = vmatprep.subr.mxu0 0.0
    %397 = vmatpush1.msra.mxu0 0.0
    %398 = vmatprep.subr.mxu0 0.0
    %399 = vmatpush1.msra.mxu0 0.0
    %400 = vmatprep.subr.mxu0 0.0
    %401 = vmatpush1.msra.mxu0 0.0
    %402 = vmatprep.subr.mxu0 0.0
    %403 = vmatpush1.msra.mxu0 0.0
    %404 = vmatprep.subr.mxu0 0.0
    %405 = vmatpush1.msra.mxu0 0.0
    %406 = vmatprep.subr.mxu0 0.0
    %407 = vmatpush1.msra.mxu0 0.0
    %408 = vmatprep.mubr.f32.mxu0 0.0
    %409 = vmatmul.mubr.f32.gmra.mrb[0].mxu0 %v342
    %v410 = vpop.f32.mrb[0].mxu0
    %v411 = vadd.f32 %v69, %v410
    %v412 = vpop.f32.mrb[0].mxu0
    %413 = vdwg.mxu0
    %v414 = vpack.c.bf16 %v338, %v338
    %416 = vrot.lane.b32.xlu0 %v414, 32
    %v417 = vpop.permute.xlu0 %416
    %v419 = vsel %vm266, %v417, 0
    %421 = vmatprep.subr.bf16.mxu0 0
    %422 = vmatpush1.bf16.msra.mxu0 %v262
    %423 = vmatprep.subr.bf16.mxu0 0
    %424 = vmatpush1.bf16.msra.mxu0 %v263
    %425 = vmatprep.subr.bf16.mxu0 0
    %426 = vmatpush1.bf16.msra.mxu0 0
    %427 = vmatprep.subr.bf16.mxu0 0
    %428 = vmatpush1.bf16.msra.mxu0 0
    %429 = vmatprep.subr.bf16.mxu0 0
    %430 = vmatpush1.bf16.msra.mxu0 0
    %431 = vmatprep.subr.bf16.mxu0 0
    %432 = vmatpush1.bf16.msra.mxu0 0
    %433 = vmatprep.subr.bf16.mxu0 0
    %434 = vmatpush1.bf16.msra.mxu0 0
    %435 = vmatprep.subr.bf16.mxu0 0
    %436 = vmatpush1.bf16.msra.mxu0 0
    %437 = vmatprep.subr.bf16.mxu0 0
    %438 = vmatpush1.bf16.msra.mxu0 0
    %439 = vmatprep.subr.bf16.mxu0 0
    %440 = vmatpush1.bf16.msra.mxu0 0
    %441 = vmatprep.subr.bf16.mxu0 0
    %442 = vmatpush1.bf16.msra.mxu0 0
    %443 = vmatprep.subr.bf16.mxu0 0
    %444 = vmatpush1.bf16.msra.mxu0 0
    %445 = vmatprep.subr.bf16.mxu0 0
    %446 = vmatpush1.bf16.msra.mxu0 0
    %447 = vmatprep.subr.bf16.mxu0 0
    %448 = vmatpush1.bf16.msra.mxu0 0
    %449 = vmatprep.subr.bf16.mxu0 0
    %450 = vmatpush1.bf16.msra.mxu0 0
    %451 = vmatprep.subr.bf16.mxu0 0
    %452 = vmatpush1.bf16.msra.mxu0 0
    %453 = vmatprep.mubr.bf16.mxu0 0
    %454 = vmatmul.mubr.bf16.gmra.mrb[0].mxu0 %v419
    %v455 = vpop.f32.mrb[0].mxu0
    %v456 = vadd.f32 0.0, %v455
    %v457 = vpop.f32.mrb[0].mxu0
    %v458 = vpop.f32.mrb[0].mxu0
    %v459 = vpop.f32.mrb[0].mxu0
    %460 = vdwg.mxu0
    %v461 = vadd.f32 %v411, %v456
    %v462 = vxor.u32 %v461, 2147483648
    %v463 = vmul.f32 %v462, 1.442695
    %v464 = vpow.pop %v463
    %v465 = vadd.f32 %v464, 1.0
    %v466 = vrcp.pop %v465
    %v467 = vmul.f32 1.0, %v466
    %v468 = vtanh.pop %v461
    %v469 = vmul.f32 %v467, %v332
    %471 = vrot.lane.b32.xlu0 %v468, 64
    %v472 = vpop.permute.xlu0 %471
    %v474 = vmul.f32 %v467, %v472
    %476 = vrot.lane.b32.xlu0 %v474, 32
    %v477 = vpop.permute.xlu0 %476
    %v479 = vadd.f32 %v469, %v477
    %v480 = vtanh.pop %v479
    %482 = vrot.lane.b32.xlu0 %v480, 64
    %v483 = vpop.permute.xlu0 %482
    %v485 = vmul.f32 %v467, %v483
    %s486 = scalar_lea.vmem %s0, 6
    %v487 = vld [vmem:[%s486] sm:$0x3]
    %v489 = vsel %vm78, %v487, 0
    %491 = vmatprep.subr.mxu0 %v85
    %492 = vmatpush1.msra.mxu0 %v83
    %493 = vmatprep.subr.mxu0 0.0
    %494 = vmatpush1.msra.mxu0 0.0
    %495 = vmatprep.subr.mxu0 0.0
    %496 = vmatpush1.msra.mxu0 0.0
    %497 = vmatprep.subr.mxu0 0.0
    %498 = vmatpush1.msra.mxu0 0.0
    %499 = vmatprep.subr.mxu0 0.0
    %500 = vmatpush1.msra.mxu0 0.0
    %501 = vmatprep.subr.mxu0 0.0
    %502 = vmatpush1.msra.mxu0 0.0
    %503 = vmatprep.subr.mxu0 0.0
    %504 = vmatpush1.msra.mxu0 0.0
    %505 = vmatprep.subr.mxu0 0.0
    %506 = vmatpush1.msra.mxu0 0.0
    %507 = vmatprep.subr.mxu0 0.0
    %508 = vmatpush1.msra.mxu0 0.0
    %509 = vmatprep.subr.mxu0 0.0
    %510 = vmatpush1.msra.mxu0 0.0
    %511 = vmatprep.subr.mxu0 0.0
    %512 = vmatpush1.msra.mxu0 0.0
    %513 = vmatprep.subr.mxu0 0.0
    %514 = vmatpush1.msra.mxu0 0.0
    %515 = vmatprep.subr.mxu0 0.0
    %516 = vmatpush1.msra.mxu0 0.0
    %517 = vmatprep.subr.mxu0 0.0
    %518 = vmatpush1.msra.mxu0 0.0
    %519 = vmatprep.subr.mxu0 0.0
    %520 = vmatpush1.msra.mxu0 0.0
    %521 = vmatprep.subr.mxu0 0.0
    %522 = vmatpush1.msra.mxu0 0.0
    %523 = vmatprep.subr.mxu0 0.0
    %524 = vmatpush1.msra.mxu0 0.0
    %525 = vmatprep.subr.mxu0 0.0
    %526 = vmatpush1.msra.mxu0 0.0
    %527 = vmatprep.subr.mxu0 0.0
    %528 = vmatpush1.msra.mxu0 0.0
    %529 = vmatprep.subr.mxu0 0.0
    %530 = vmatpush1.msra.mxu0 0.0
    %531 = vmatprep.subr.mxu0 0.0
    %532 = vmatpush1.msra.mxu0 0.0
    %533 = vmatprep.subr.mxu0 0.0
    %534 = vmatpush1.msra.mxu0 0.0
    %535 = vmatprep.subr.mxu0 0.0
    %536 = vmatpush1.msra.mxu0 0.0
    %537 = vmatprep.subr.mxu0 0.0
    %538 = vmatpush1.msra.mxu0 0.0
    %539 = vmatprep.subr.mxu0 0.0
    %540 = vmatpush1.msra.mxu0 0.0
    %541 = vmatprep.subr.mxu0 0.0
    %542 = vmatpush1.msra.mxu0 0.0
    %543 = vmatprep.subr.mxu0 0.0
    %544 = vmatpush1.msra.mxu0 0.0
    %545 = vmatprep.subr.mxu0 0.0
    %546 = vmatpush1.msra.mxu0 0.0
    %547 = vmatprep.subr.mxu0 0.0
    %548 = vmatpush1.msra.mxu0 0.0
    %549 = vmatprep.subr.mxu0 0.0
    %550 = vmatpush1.msra.mxu0 0.0
    %551 = vmatprep.subr.mxu0 0.0
    %552 = vmatpush1.msra.mxu0 0.0
    %553 = vmatprep.subr.mxu0 0.0
    %554 = vmatpush1.msra.mxu0 0.0
    %555 = vmatprep.mubr.f32.mxu0 0.0
    %556 = vmatmul.mubr.f32.gmra.mrb[0].mxu0 %v489
    %v557 = vpop.f32.mrb[0].mxu0
    %v558 = vadd.f32 %v69, %v557
    %v559 = vpop.f32.mrb[0].mxu0
    %560 = vdwg.mxu0
    %v561 = vpack.c.bf16 %v485, %v485
    %563 = vrot.lane.b32.xlu0 %v561, 32
    %v564 = vpop.permute.xlu0 %563
    %v566 = vsel %vm266, %v564, 0
    %568 = vmatprep.subr.bf16.mxu0 0
    %569 = vmatpush1.bf16.msra.mxu0 %v262
    %570 = vmatprep.subr.bf16.mxu0 0
    %571 = vmatpush1.bf16.msra.mxu0 %v263
    %572 = vmatprep.subr.bf16.mxu0 0
    %573 = vmatpush1.bf16.msra.mxu0 0
    %574 = vmatprep.subr.bf16.mxu0 0
    %575 = vmatpush1.bf16.msra.mxu0 0
    %576 = vmatprep.subr.bf16.mxu0 0
    %577 = vmatpush1.bf16.msra.mxu0 0
    %578 = vmatprep.subr.bf16.mxu0 0
    %579 = vmatpush1.bf16.msra.mxu0 0
    %580 = vmatprep.subr.bf16.mxu0 0
    %581 = vmatpush1.bf16.msra.mxu0 0
    %582 = vmatprep.subr.bf16.mxu0 0
    %583 = vmatpush1.bf16.msra.mxu0 0
    %584 = vmatprep.subr.bf16.mxu0 0
    %585 = vmatpush1.bf16.msra.mxu0 0
    %586 = vmatprep.subr.bf16.mxu0 0
    %587 = vmatpush1.bf16.msra.mxu0 0
    %588 = vmatprep.subr.bf16.mxu0 0
    %589 = vmatpush1.bf16.msra.mxu0 0
    %590 = vmatprep.subr.bf16.mxu0 0
    %591 = vmatpush1.bf16.msra.mxu0 0
    %592 = vmatprep.subr.bf16.mxu0 0
    %593 = vmatpush1.bf16.msra.mxu0 0
    %594 = vmatprep.subr.bf16.mxu0 0
    %595 = vmatpush1.bf16.msra.mxu0 0
    %596 = vmatprep.subr.bf16.mxu0 0
    %597 = vmatpush1.bf16.msra.mxu0 0
    %598 = vmatprep.subr.bf16.mxu0 0
    %599 = vmatpush1.bf16.msra.mxu0 0
    %600 = vmatprep.mubr.bf16.mxu0 0
    %601 = vmatmul.mubr.bf16.gmra.mrb[0].mxu0 %v566
    %v602 = vpop.f32.mrb[0].mxu0
    %v603 = vadd.f32 0.0, %v602
    %v604 = vpop.f32.mrb[0].mxu0
    %v605 = vpop.f32.mrb[0].mxu0
    %v606 = vpop.f32.mrb[0].mxu0
    %607 = vdwg.mxu0
    %v608 = vadd.f32 %v558, %v603
    %v609 = vxor.u32 %v608, 2147483648
    %v610 = vmul.f32 %v609, 1.442695
    %v611 = vpow.pop %v610
    %v612 = vadd.f32 %v611, 1.0
    %v613 = vrcp.pop %v612
    %v614 = vmul.f32 1.0, %v613
    %v615 = vtanh.pop %v608
    %v616 = vmul.f32 %v614, %v479
    %618 = vrot.lane.b32.xlu0 %v615, 64
    %v619 = vpop.permute.xlu0 %618
    %v621 = vmul.f32 %v614, %v619
    %623 = vrot.lane.b32.xlu0 %v621, 32
    %v624 = vpop.permute.xlu0 %623
    %v626 = vadd.f32 %v616, %v624
    %v627 = vtanh.pop %v626
    %629 = vrot.lane.b32.xlu0 %v627, 64
    %v630 = vpop.permute.xlu0 %629
    %v632 = vmul.f32 %v614, %v630
    %s633 = scalar_lea.vmem %s0, 8
    %v634 = vld [vmem:[%s633] sm:$0x3]
    %v636 = vsel %vm78, %v634, 0
    %638 = vmatprep.subr.mxu0 %v85
    %639 = vmatpush1.msra.mxu0 %v83
    %640 = vmatprep.subr.mxu0 0.0
    %641 = vmatpush1.msra.mxu0 0.0
    %642 = vmatprep.subr.mxu0 0.0
    %643 = vmatpush1.msra.mxu0 0.0
    %644 = vmatprep.subr.mxu0 0.0
    %645 = vmatpush1.msra.mxu0 0.0
    %646 = vmatprep.subr.mxu0 0.0
    %647 = vmatpush1.msra.mxu0 0.0
    %648 = vmatprep.subr.mxu0 0.0
    %649 = vmatpush1.msra.mxu0 0.0
    %650 = vmatprep.subr.mxu0 0.0
    %651 = vmatpush1.msra.mxu0 0.0
    %652 = vmatprep.subr.mxu0 0.0
    %653 = vmatpush1.msra.mxu0 0.0
    %654 = vmatprep.subr.mxu0 0.0
    %655 = vmatpush1.msra.mxu0 0.0
    %656 = vmatprep.subr.mxu0 0.0
    %657 = vmatpush1.msra.mxu0 0.0
    %658 = vmatprep.subr.mxu0 0.0
    %659 = vmatpush1.msra.mxu0 0.0
    %660 = vmatprep.subr.mxu0 0.0
    %661 = vmatpush1.msra.mxu0 0.0
    %662 = vmatprep.subr.mxu0 0.0
    %663 = vmatpush1.msra.mxu0 0.0
    %664 = vmatprep.subr.mxu0 0.0
    %665 = vmatpush1.msra.mxu0 0.0
    %666 = vmatprep.subr.mxu0 0.0
    %667 = vmatpush1.msra.mxu0 0.0
    %668 = vmatprep.subr.mxu0 0.0
    %669 = vmatpush1.msra.mxu0 0.0
    %670 = vmatprep.subr.mxu0 0.0
    %671 = vmatpush1.msra.mxu0 0.0
    %672 = vmatprep.subr.mxu0 0.0
    %673 = vmatpush1.msra.mxu0 0.0
    %674 = vmatprep.subr.mxu0 0.0
    %675 = vmatpush1.msra.mxu0 0.0
    %676 = vmatprep.subr.mxu0 0.0
    %677 = vmatpush1.msra.mxu0 0.0
    %678 = vmatprep.subr.mxu0 0.0
    %679 = vmatpush1.msra.mxu0 0.0
    %680 = vmatprep.subr.mxu0 0.0
    %681 = vmatpush1.msra.mxu0 0.0
    %682 = vmatprep.subr.mxu0 0.0
    %683 = vmatpush1.msra.mxu0 0.0
    %684 = vmatprep.subr.mxu0 0.0
    %685 = vmatpush1.msra.mxu0 0.0
    %686 = vmatprep.subr.mxu0 0.0
    %687 = vmatpush1.msra.mxu0 0.0
    %688 = vmatprep.subr.mxu0 0.0
    %689 = vmatpush1.msra.mxu0 0.0
    %690 = vmatprep.subr.mxu0 0.0
    %691 = vmatpush1.msra.mxu0 0.0
    %692 = vmatprep.subr.mxu0 0.0
    %693 = vmatpush1.msra.mxu0 0.0
    %694 = vmatprep.subr.mxu0 0.0
    %695 = vmatpush1.msra.mxu0 0.0
    %696 = vmatprep.subr.mxu0 0.0
    %697 = vmatpush1.msra.mxu0 0.0
    %698 = vmatprep.subr.mxu0 0.0
    %699 = vmatpush1.msra.mxu0 0.0
    %700 = vmatprep.subr.mxu0 0.0
    %701 = vmatpush1.msra.mxu0 0.0
    %702 = vmatprep.mubr.f32.mxu0 0.0
    %703 = vmatmul.mubr.f32.gmra.mrb[0].mxu0 %v636
    %v704 = vpop.f32.mrb[0].mxu0
    %v705 = vadd.f32 %v69, %v704
    %v706 = vpop.f32.mrb[0].mxu0
    %707 = vdwg.mxu0
    %v708 = vpack.c.bf16 %v632, %v632
    %710 = vrot.lane.b32.xlu0 %v708, 32
    %v711 = vpop.permute.xlu0 %710
    %v713 = vsel %vm266, %v711, 0
    %715 = vmatprep.subr.bf16.mxu0 0
    %716 = vmatpush1.bf16.msra.mxu0 %v262
    %717 = vmatprep.subr.bf16.mxu0 0
    %718 = vmatpush1.bf16.msra.mxu0 %v263
    %719 = vmatprep.subr.bf16.mxu0 0
    %720 = vmatpush1.bf16.msra.mxu0 0
    %721 = vmatprep.subr.bf16.mxu0 0
    %722 = vmatpush1.bf16.msra.mxu0 0
    %723 = vmatprep.subr.bf16.mxu0 0
    %724 = vmatpush1.bf16.msra.mxu0 0
    %725 = vmatprep.subr.bf16.mxu0 0
    %726 = vmatpush1.bf16.msra.mxu0 0
    %727 = vmatprep.subr.bf16.mxu0 0
    %728 = vmatpush1.bf16.msra.mxu0 0
    %729 = vmatprep.subr.bf16.mxu0 0
    %730 = vmatpush1.bf16.msra.mxu0 0
    %731 = vmatprep.subr.bf16.mxu0 0
    %732 = vmatpush1.bf16.msra.mxu0 0
    %733 = vmatprep.subr.bf16.mxu0 0
    %734 = vmatpush1.bf16.msra.mxu0 0
    %735 = vmatprep.subr.bf16.mxu0 0
    %736 = vmatpush1.bf16.msra.mxu0 0
    %737 = vmatprep.subr.bf16.mxu0 0
    %738 = vmatpush1.bf16.msra.mxu0 0
    %739 = vmatprep.subr.bf16.mxu0 0
    %740 = vmatpush1.bf16.msra.mxu0 0
    %741 = vmatprep.subr.bf16.mxu0 0
    %742 = vmatpush1.bf16.msra.mxu0 0
    %743 = vmatprep.subr.bf16.mxu0 0
    %744 = vmatpush1.bf16.msra.mxu0 0
    %745 = vmatprep.subr.bf16.mxu0 0
    %746 = vmatpush1.bf16.msra.mxu0 0
    %747 = vmatprep.mubr.bf16.mxu0 0
    %748 = vmatmul.mubr.bf16.gmra.mrb[0].mxu0 %v713
    %v749 = vpop.f32.mrb[0].mxu0
    %v750 = vadd.f32 0.0, %v749
    %v751 = vpop.f32.mrb[0].mxu0
    %v752 = vpop.f32.mrb[0].mxu0
    %v753 = vpop.f32.mrb[0].mxu0
    %754 = vdwg.mxu0
    %v755 = vadd.f32 %v705, %v750
    %v756 = vxor.u32 %v755, 2147483648
    %v757 = vmul.f32 %v756, 1.442695
    %v758 = vpow.pop %v757
    %v759 = vadd.f32 %v758, 1.0
    %v760 = vrcp.pop %v759
    %v761 = vmul.f32 1.0, %v760
    %v762 = vtanh.pop %v755
    %v763 = vmul.f32 %v761, %v626
    %765 = vrot.lane.b32.xlu0 %v762, 64
    %v766 = vpop.permute.xlu0 %765
    %v768 = vmul.f32 %v761, %v766
    %770 = vrot.lane.b32.xlu0 %v768, 32
    %v771 = vpop.permute.xlu0 %770
    %v773 = vadd.f32 %v763, %v771
    %v774 = vtanh.pop %v773
    %776 = vrot.lane.b32.xlu0 %v774, 64
    %v777 = vpop.permute.xlu0 %776
    %v779 = vmul.f32 %v761, %v777
    %s780 = scalar_lea.vmem %s0, 10
    %v781 = vld [vmem:[%s780] sm:$0x3]
    %v783 = vsel %vm78, %v781, 0
    %785 = vmatprep.subr.mxu0 %v85
    %786 = vmatpush1.msra.mxu0 %v83
    %787 = vmatprep.subr.mxu0 0.0
    %788 = vmatpush1.msra.mxu0 0.0
    %789 = vmatprep.subr.mxu0 0.0
    %790 = vmatpush1.msra.mxu0 0.0
    %791 = vmatprep.subr.mxu0 0.0
    %792 = vmatpush1.msra.mxu0 0.0
    %793 = vmatprep.subr.mxu0 0.0
    %794 = vmatpush1.msra.mxu0 0.0
    %795 = vmatprep.subr.mxu0 0.0
    %796 = vmatpush1.msra.mxu0 0.0
    %797 = vmatprep.subr.mxu0 0.0
    %798 = vmatpush1.msra.mxu0 0.0
    %799 = vmatprep.subr.mxu0 0.0
    %800 = vmatpush1.msra.mxu0 0.0
    %801 = vmatprep.subr.mxu0 0.0
    %802 = vmatpush1.msra.mxu0 0.0
    %803 = vmatprep.subr.mxu0 0.0
    %804 = vmatpush1.msra.mxu0 0.0
    %805 = vmatprep.subr.mxu0 0.0
    %806 = vmatpush1.msra.mxu0 0.0
    %807 = vmatprep.subr.mxu0 0.0
    %808 = vmatpush1.msra.mxu0 0.0
    %809 = vmatprep.subr.mxu0 0.0
    %810 = vmatpush1.msra.mxu0 0.0
    %811 = vmatprep.subr.mxu0 0.0
    %812 = vmatpush1.msra.mxu0 0.0
    %813 = vmatprep.subr.mxu0 0.0
    %814 = vmatpush1.msra.mxu0 0.0
    %815 = vmatprep.subr.mxu0 0.0
    %816 = vmatpush1.msra.mxu0 0.0
    %817 = vmatprep.subr.mxu0 0.0
    %818 = vmatpush1.msra.mxu0 0.0
    %819 = vmatprep.subr.mxu0 0.0
    %820 = vmatpush1.msra.mxu0 0.0
    %821 = vmatprep.subr.mxu0 0.0
    %822 = vmatpush1.msra.mxu0 0.0
    %823 = vmatprep.subr.mxu0 0.0
    %824 = vmatpush1.msra.mxu0 0.0
    %825 = vmatprep.subr.mxu0 0.0
    %826 = vmatpush1.msra.mxu0 0.0
    %827 = vmatprep.subr.mxu0 0.0
    %828 = vmatpush1.msra.mxu0 0.0
    %829 = vmatprep.subr.mxu0 0.0
    %830 = vmatpush1.msra.mxu0 0.0
    %831 = vmatprep.subr.mxu0 0.0
    %832 = vmatpush1.msra.mxu0 0.0
    %833 = vmatprep.subr.mxu0 0.0
    %834 = vmatpush1.msra.mxu0 0.0
    %835 = vmatprep.subr.mxu0 0.0
    %836 = vmatpush1.msra.mxu0 0.0
    %837 = vmatprep.subr.mxu0 0.0
    %838 = vmatpush1.msra.mxu0 0.0
    %839 = vmatprep.subr.mxu0 0.0
    %840 = vmatpush1.msra.mxu0 0.0
    %841 = vmatprep.subr.mxu0 0.0
    %842 = vmatpush1.msra.mxu0 0.0
    %843 = vmatprep.subr.mxu0 0.0
    %844 = vmatpush1.msra.mxu0 0.0
    %845 = vmatprep.subr.mxu0 0.0
    %846 = vmatpush1.msra.mxu0 0.0
    %847 = vmatprep.subr.mxu0 0.0
    %848 = vmatpush1.msra.mxu0 0.0
    %849 = vmatprep.mubr.f32.mxu0 0.0
    %850 = vmatmul.mubr.f32.gmra.mrb[0].mxu0 %v783
    %v851 = vpop.f32.mrb[0].mxu0
    %v852 = vadd.f32 %v69, %v851
    %v853 = vpop.f32.mrb[0].mxu0
    %854 = vdwg.mxu0
    %v855 = vpack.c.bf16 %v779, %v779
    %857 = vrot.lane.b32.xlu0 %v855, 32
    %v858 = vpop.permute.xlu0 %857
    %v860 = vsel %vm266, %v858, 0
    %862 = vmatprep.subr.bf16.mxu0 0
    %863 = vmatpush1.bf16.msra.mxu0 %v262
    %864 = vmatprep.subr.bf16.mxu0 0
    %865 = vmatpush1.bf16.msra.mxu0 %v263
    %866 = vmatprep.subr.bf16.mxu0 0
    %867 = vmatpush1.bf16.msra.mxu0 0
    %868 = vmatprep.subr.bf16.mxu0 0
    %869 = vmatpush1.bf16.msra.mxu0 0
    %870 = vmatprep.subr.bf16.mxu0 0
    %871 = vmatpush1.bf16.msra.mxu0 0
    %872 = vmatprep.subr.bf16.mxu0 0
    %873 = vmatpush1.bf16.msra.mxu0 0
    %874 = vmatprep.subr.bf16.mxu0 0
    %875 = vmatpush1.bf16.msra.mxu0 0
    %876 = vmatprep.subr.bf16.mxu0 0
    %877 = vmatpush1.bf16.msra.mxu0 0
    %878 = vmatprep.subr.bf16.mxu0 0
    %879 = vmatpush1.bf16.msra.mxu0 0
    %880 = vmatprep.subr.bf16.mxu0 0
    %881 = vmatpush1.bf16.msra.mxu0 0
    %882 = vmatprep.subr.bf16.mxu0 0
    %883 = vmatpush1.bf16.msra.mxu0 0
    %884 = vmatprep.subr.bf16.mxu0 0
    %885 = vmatpush1.bf16.msra.mxu0 0
    %886 = vmatprep.subr.bf16.mxu0 0
    %887 = vmatpush1.bf16.msra.mxu0 0
    %888 = vmatprep.subr.bf16.mxu0 0
    %889 = vmatpush1.bf16.msra.mxu0 0
    %890 = vmatprep.subr.bf16.mxu0 0
    %891 = vmatpush1.bf16.msra.mxu0 0
    %892 = vmatprep.subr.bf16.mxu0 0
    %893 = vmatpush1.bf16.msra.mxu0 0
    %894 = vmatprep.mubr.bf16.mxu0 0
    %895 = vmatmul.mubr.bf16.gmra.mrb[0].mxu0 %v860
    %v896 = vpop.f32.mrb[0].mxu0
    %v897 = vadd.f32 0.0, %v896
    %v898 = vpop.f32.mrb[0].mxu0
    %v899 = vpop.f32.mrb[0].mxu0
    %v900 = vpop.f32.mrb[0].mxu0
    %901 = vdwg.mxu0
    %v902 = vadd.f32 %v852, %v897
    %v903 = vxor.u32 %v902, 2147483648
    %v904 = vmul.f32 %v903, 1.442695
    %v905 = vpow.pop %v904
    %v906 = vadd.f32 %v905, 1.0
    %v907 = vrcp.pop %v906
    %v908 = vmul.f32 1.0, %v907
    %v909 = vtanh.pop %v902
    %v910 = vmul.f32 %v908, %v773
    %912 = vrot.lane.b32.xlu0 %v909, 64
    %v913 = vpop.permute.xlu0 %912
    %v915 = vmul.f32 %v908, %v913
    %917 = vrot.lane.b32.xlu0 %v915, 32
    %v918 = vpop.permute.xlu0 %917
    %v920 = vadd.f32 %v910, %v918
    %v921 = vtanh.pop %v920
    %923 = vrot.lane.b32.xlu0 %v921, 64
    %v924 = vpop.permute.xlu0 %923
    %v926 = vmul.f32 %v908, %v924
    %s927 = scalar_lea.vmem %s0, 12
    %v928 = vld [vmem:[%s927] sm:$0x3]
    %v930 = vsel %vm78, %v928, 0
    %932 = vmatprep.subr.mxu0 %v85
    %933 = vmatpush1.msra.mxu0 %v83
    %934 = vmatprep.subr.mxu0 0.0
    %935 = vmatpush1.msra.mxu0 0.0
    %936 = vmatprep.subr.mxu0 0.0
    %937 = vmatpush1.msra.mxu0 0.0
    %938 = vmatprep.subr.mxu0 0.0
    %939 = vmatpush1.msra.mxu0 0.0
    %940 = vmatprep.subr.mxu0 0.0
    %941 = vmatpush1.msra.mxu0 0.0
    %942 = vmatprep.subr.mxu0 0.0
    %943 = vmatpush1.msra.mxu0 0.0
    %944 = vmatprep.subr.mxu0 0.0
    %945 = vmatpush1.msra.mxu0 0.0
    %946 = vmatprep.subr.mxu0 0.0
    %947 = vmatpush1.msra.mxu0 0.0
    %948 = vmatprep.subr.mxu0 0.0
    %949 = vmatpush1.msra.mxu0 0.0
    %950 = vmatprep.subr.mxu0 0.0
    %951 = vmatpush1.msra.mxu0 0.0
    %952 = vmatprep.subr.mxu0 0.0
    %953 = vmatpush1.msra.mxu0 0.0
    %954 = vmatprep.subr.mxu0 0.0
    %955 = vmatpush1.msra.mxu0 0.0
    %956 = vmatprep.subr.mxu0 0.0
    %957 = vmatpush1.msra.mxu0 0.0
    %958 = vmatprep.subr.mxu0 0.0
    %959 = vmatpush1.msra.mxu0 0.0
    %960 = vmatprep.subr.mxu0 0.0
    %961 = vmatpush1.msra.mxu0 0.0
    %962 = vmatprep.subr.mxu0 0.0
    %963 = vmatpush1.msra.mxu0 0.0
    %964 = vmatprep.subr.mxu0 0.0
    %965 = vmatpush1.msra.mxu0 0.0
    %966 = vmatprep.subr.mxu0 0.0
    %967 = vmatpush1.msra.mxu0 0.0
    %968 = vmatprep.subr.mxu0 0.0
    %969 = vmatpush1.msra.mxu0 0.0
    %970 = vmatprep.subr.mxu0 0.0
    %971 = vmatpush1.msra.mxu0 0.0
    %972 = vmatprep.subr.mxu0 0.0
    %973 = vmatpush1.msra.mxu0 0.0
    %974 = vmatprep.subr.mxu0 0.0
    %975 = vmatpush1.msra.mxu0 0.0
    %976 = vmatprep.subr.mxu0 0.0
    %977 = vmatpush1.msra.mxu0 0.0
    %978 = vmatprep.subr.mxu0 0.0
    %979 = vmatpush1.msra.mxu0 0.0
    %980 = vmatprep.subr.mxu0 0.0
    %981 = vmatpush1.msra.mxu0 0.0
    %982 = vmatprep.subr.mxu0 0.0
    %983 = vmatpush1.msra.mxu0 0.0
    %984 = vmatprep.subr.mxu0 0.0
    %985 = vmatpush1.msra.mxu0 0.0
    %986 = vmatprep.subr.mxu0 0.0
    %987 = vmatpush1.msra.mxu0 0.0
    %988 = vmatprep.subr.mxu0 0.0
    %989 = vmatpush1.msra.mxu0 0.0
    %990 = vmatprep.subr.mxu0 0.0
    %991 = vmatpush1.msra.mxu0 0.0
    %992 = vmatprep.subr.mxu0 0.0
    %993 = vmatpush1.msra.mxu0 0.0
    %994 = vmatprep.subr.mxu0 0.0
    %995 = vmatpush1.msra.mxu0 0.0
    %996 = vmatprep.mubr.f32.mxu0 0.0
    %997 = vmatmul.mubr.f32.gmra.mrb[0].mxu0 %v930
    %v998 = vpop.f32.mrb[0].mxu0
    %v999 = vadd.f32 %v69, %v998
    %v1000 = vpop.f32.mrb[0].mxu0
    %1001 = vdwg.mxu0
    %v1002 = vpack.c.bf16 %v926, %v926
    %1004 = vrot.lane.b32.xlu0 %v1002, 32
    %v1005 = vpop.permute.xlu0 %1004
    %v1007 = vsel %vm266, %v1005, 0
    %1009 = vmatprep.subr.bf16.mxu0 0
    %1010 = vmatpush1.bf16.msra.mxu0 %v262
    %1011 = vmatprep.subr.bf16.mxu0 0
    %1012 = vmatpush1.bf16.msra.mxu0 %v263
    %1013 = vmatprep.subr.bf16.mxu0 0
    %1014 = vmatpush1.bf16.msra.mxu0 0
    %1015 = vmatprep.subr.bf16.mxu0 0
    %1016 = vmatpush1.bf16.msra.mxu0 0
    %1017 = vmatprep.subr.bf16.mxu0 0
    %1018 = vmatpush1.bf16.msra.mxu0 0
    %1019 = vmatprep.subr.bf16.mxu0 0
    %1020 = vmatpush1.bf16.msra.mxu0 0
    %1021 = vmatprep.subr.bf16.mxu0 0
    %1022 = vmatpush1.bf16.msra.mxu0 0
    %1023 = vmatprep.subr.bf16.mxu0 0
    %1024 = vmatpush1.bf16.msra.mxu0 0
    %1025 = vmatprep.subr.bf16.mxu0 0
    %1026 = vmatpush1.bf16.msra.mxu0 0
    %1027 = vmatprep.subr.bf16.mxu0 0
    %1028 = vmatpush1.bf16.msra.mxu0 0
    %1029 = vmatprep.subr.bf16.mxu0 0
    %1030 = vmatpush1.bf16.msra.mxu0 0
    %1031 = vmatprep.subr.bf16.mxu0 0
    %1032 = vmatpush1.bf16.msra.mxu0 0
    %1033 = vmatprep.subr.bf16.mxu0 0
    %1034 = vmatpush1.bf16.msra.mxu0 0
    %1035 = vmatprep.subr.bf16.mxu0 0
    %1036 = vmatpush1.bf16.msra.mxu0 0
    %1037 = vmatprep.subr.bf16.mxu0 0
    %1038 = vmatpush1.bf16.msra.mxu0 0
    %1039 = vmatprep.subr.bf16.mxu0 0
    %1040 = vmatpush1.bf16.msra.mxu0 0
    %1041 = vmatprep.mubr.bf16.mxu0 0
    %1042 = vmatmul.mubr.bf16.gmra.mrb[0].mxu0 %v1007
    %v1043 = vpop.f32.mrb[0].mxu0
    %v1044 = vadd.f32 0.0, %v1043
    %v1045 = vpop.f32.mrb[0].mxu0
    %v1046 = vpop.f32.mrb[0].mxu0
    %v1047 = vpop.f32.mrb[0].mxu0
    %1048 = vdwg.mxu0
    %v1049 = vadd.f32 %v999, %v1044
    %v1050 = vxor.u32 %v1049, 2147483648
    %v1051 = vmul.f32 %v1050, 1.442695
    %v1052 = vpow.pop %v1051
    %v1053 = vadd.f32 %v1052, 1.0
    %v1054 = vrcp.pop %v1053
    %v1055 = vmul.f32 1.0, %v1054
    %v1056 = vtanh.pop %v1049
    %v1057 = vmul.f32 %v1055, %v920
    %1059 = vrot.lane.b32.xlu0 %v1056, 64
    %v1060 = vpop.permute.xlu0 %1059
    %v1062 = vmul.f32 %v1055, %v1060
    %1064 = vrot.lane.b32.xlu0 %v1062, 32
    %v1065 = vpop.permute.xlu0 %1064
    %v1067 = vadd.f32 %v1057, %v1065
    %v1068 = vtanh.pop %v1067
    %1070 = vrot.lane.b32.xlu0 %v1068, 64
    %v1071 = vpop.permute.xlu0 %1070
    %v1073 = vmul.f32 %v1055, %v1071
    %s1074 = scalar_lea.vmem %s0, 14
    %v1075 = vld [vmem:[%s1074] sm:$0x3]
    %v1077 = vsel %vm78, %v1075, 0
    %1079 = vmatprep.subr.mxu0 %v85
    %1080 = vmatpush1.msra.mxu0 %v83
    %1081 = vmatprep.subr.mxu0 0.0
    %1082 = vmatpush1.msra.mxu0 0.0
    %1083 = vmatprep.subr.mxu0 0.0
    %1084 = vmatpush1.msra.mxu0 0.0
    %1085 = vmatprep.subr.mxu0 0.0
    %1086 = vmatpush1.msra.mxu0 0.0
    %1087 = vmatprep.subr.mxu0 0.0
    %1088 = vmatpush1.msra.mxu0 0.0
    %1089 = vmatprep.subr.mxu0 0.0
    %1090 = vmatpush1.msra.mxu0 0.0
    %1091 = vmatprep.subr.mxu0 0.0
    %1092 = vmatpush1.msra.mxu0 0.0
    %1093 = vmatprep.subr.mxu0 0.0
    %1094 = vmatpush1.msra.mxu0 0.0
    %1095 = vmatprep.subr.mxu0 0.0
    %1096 = vmatpush1.msra.mxu0 0.0
    %1097 = vmatprep.subr.mxu0 0.0
    %1098 = vmatpush1.msra.mxu0 0.0
    %1099 = vmatprep.subr.mxu0 0.0
    %1100 = vmatpush1.msra.mxu0 0.0
    %1101 = vmatprep.subr.mxu0 0.0
    %1102 = vmatpush1.msra.mxu0 0.0
    %1103 = vmatprep.subr.mxu0 0.0
    %1104 = vmatpush1.msra.mxu0 0.0
    %1105 = vmatprep.subr.mxu0 0.0
    %1106 = vmatpush1.msra.mxu0 0.0
    %1107 = vmatprep.subr.mxu0 0.0
    %1108 = vmatpush1.msra.mxu0 0.0
    %1109 = vmatprep.subr.mxu0 0.0
    %1110 = vmatpush1.msra.mxu0 0.0
    %1111 = vmatprep.subr.mxu0 0.0
    %1112 = vmatpush1.msra.mxu0 0.0
    %1113 = vmatprep.subr.mxu0 0.0
    %1114 = vmatpush1.msra.mxu0 0.0
    %1115 = vmatprep.subr.mxu0 0.0
    %1116 = vmatpush1.msra.mxu0 0.0
    %1117 = vmatprep.subr.mxu0 0.0
    %1118 = vmatpush1.msra.mxu0 0.0
    %1119 = vmatprep.subr.mxu0 0.0
    %1120 = vmatpush1.msra.mxu0 0.0
    %1121 = vmatprep.subr.mxu0 0.0
    %1122 = vmatpush1.msra.mxu0 0.0
    %1123 = vmatprep.subr.mxu0 0.0
    %1124 = vmatpush1.msra.mxu0 0.0
    %1125 = vmatprep.subr.mxu0 0.0
    %1126 = vmatpush1.msra.mxu0 0.0
    %1127 = vmatprep.subr.mxu0 0.0
    %1128 = vmatpush1.msra.mxu0 0.0
    %1129 = vmatprep.subr.mxu0 0.0
    %1130 = vmatpush1.msra.mxu0 0.0
    %1131 = vmatprep.subr.mxu0 0.0
    %1132 = vmatpush1.msra.mxu0 0.0
    %1133 = vmatprep.subr.mxu0 0.0
    %1134 = vmatpush1.msra.mxu0 0.0
    %1135 = vmatprep.subr.mxu0 0.0
    %1136 = vmatpush1.msra.mxu0 0.0
    %1137 = vmatprep.subr.mxu0 0.0
    %1138 = vmatpush1.msra.mxu0 0.0
    %1139 = vmatprep.subr.mxu0 0.0
    %1140 = vmatpush1.msra.mxu0 0.0
    %1141 = vmatprep.subr.mxu0 0.0
    %1142 = vmatpush1.msra.mxu0 0.0
    %1143 = vmatprep.mubr.f32.mxu0 0.0
    %1144 = vmatmul.mubr.f32.gmra.mrb[0].mxu0 %v1077
    %v1145 = vpop.f32.mrb[0].mxu0
    %v1146 = vadd.f32 %v69, %v1145
    %v1147 = vpop.f32.mrb[0].mxu0
    %v1148 = vadd.f32 %v73, %v1147
    %1149 = vdwg.mxu0
    %v1150 = vpack.c.bf16 %v1073, %v1073
    %1152 = vrot.lane.b32.xlu0 %v1150, 32
    %v1153 = vpop.permute.xlu0 %1152
    %v1155 = vsel %vm266, %v1153, 0
    %1157 = vmatprep.subr.bf16.mxu0 0
    %1158 = vmatpush1.bf16.msra.mxu0 %v262
    %1159 = vmatprep.subr.bf16.mxu0 0
    %1160 = vmatpush1.bf16.msra.mxu0 %v263
    %1161 = vmatprep.subr.bf16.mxu0 0
    %1162 = vmatpush1.bf16.msra.mxu0 0
    %1163 = vmatprep.subr.bf16.mxu0 0
    %1164 = vmatpush1.bf16.msra.mxu0 0
    %1165 = vmatprep.subr.bf16.mxu0 0
    %1166 = vmatpush1.bf16.msra.mxu0 0
    %1167 = vmatprep.subr.bf16.mxu0 0
    %1168 = vmatpush1.bf16.msra.mxu0 0
    %1169 = vmatprep.subr.bf16.mxu0 0
    %1170 = vmatpush1.bf16.msra.mxu0 0
    %1171 = vmatprep.subr.bf16.mxu0 0
    %1172 = vmatpush1.bf16.msra.mxu0 0
    %1173 = vmatprep.subr.bf16.mxu0 0
    %1174 = vmatpush1.bf16.msra.mxu0 0
    %1175 = vmatprep.subr.bf16.mxu0 0
    %1176 = vmatpush1.bf16.msra.mxu0 0
    %1177 = vmatprep.subr.bf16.mxu0 0
    %1178 = vmatpush1.bf16.msra.mxu0 0
    %1179 = vmatprep.subr.bf16.mxu0 0
    %1180 = vmatpush1.bf16.msra.mxu0 0
    %1181 = vmatprep.subr.bf16.mxu0 0
    %1182 = vmatpush1.bf16.msra.mxu0 0
    %1183 = vmatprep.subr.bf16.mxu0 0
    %1184 = vmatpush1.bf16.msra.mxu0 0
    %1185 = vmatprep.subr.bf16.mxu0 0
    %1186 = vmatpush1.bf16.msra.mxu0 0
    %1187 = vmatprep.subr.bf16.mxu0 0
    %1188 = vmatpush1.bf16.msra.mxu0 0
    %1189 = vmatprep.mubr.bf16.mxu0 0
    %1190 = vmatmul.mubr.bf16.gmra.mrb[0].mxu0 %v1155
    %v1191 = vpop.f32.mrb[0].mxu0
    %v1192 = vadd.f32 0.0, %v1191
    %v1193 = vpop.f32.mrb[0].mxu0
    %v1194 = vpop.f32.mrb[0].mxu0
    %v1195 = vpop.f32.mrb[0].mxu0
    %1196 = vdwg.mxu0
    %v1197 = vadd.f32 %v1146, %v1192
    %v1198 = vxor.u32 %v1197, 2147483648
    %v1199 = vmul.f32 %v1198, 1.442695
    %v1200 = vpow.pop %v1199
    %v1201 = vadd.f32 %v1200, 1.0
    %v1202 = vrcp.pop %v1201
    %v1203 = vmul.f32 1.0, %v1202
    %v1204 = vtanh.pop %v1197
    %v1205 = vmul.f32 %v1203, %v1067
    %1207 = vrot.lane.b32.xlu0 %v1204, 64
    %v1208 = vpop.permute.xlu0 %1207
    %v1210 = vmul.f32 %v1203, %v1208
    %1212 = vrot.lane.b32.xlu0 %v1210, 32
    %v1213 = vpop.permute.xlu0 %1212
    %v1215 = vadd.f32 %v1205, %v1213
    %v1216 = vtanh.pop %v1215
    %1218 = vrot.lane.b32.xlu0 %v1216, 64
    %v1219 = vpop.permute.xlu0 %1218
    %v1221 = vmul.f32 %v1203, %v1219
    %v1222 = vxor.u32 %v1148, 2147483648
    %v1223 = vmul.f32 %v1222, 1.442695
    %v1224 = vpow.pop %v1223
    %v1225 = vadd.f32 %v1224, 1.0
    %v1226 = vrcp.pop %v1225
    %v1227 = vmul.f32 1.0, %v1226
    %v1228 = vtanh.pop %v1148
    %1230 = vrot.lane.b32.xlu0 %v1228, 64
    %v1231 = vpop.permute.xlu0 %1230
    %v1233 = vmul.f32 %v1227, %v1231
    %v1234 = vtanh.pop %v1233
    %1236 = vrot.lane.b32.xlu0 %v1234, 96
    %v1237 = vpop.permute.xlu0 %1236
    %v1239 = vmul.f32 %v1227, %v1237
    %v1240 = vld [vmem:[%s4] sm:$0xff]
    %v1241 = vld [vmem:[%s4 + $0x8] sm:$0xff]
    %v1242 = vld [vmem:[%s4 + $0x10] sm:$0xff]
    %v1243 = vld [vmem:[%s4 + $0x18] sm:$0xff]
    %v1244 = vld [vmem:[%s5] sm:$0xff]
    %v1245 = vld [vmem:[%s5 + $0x8] sm:$0xff]
    %v1246 = vld [vmem:[%s5 + $0x10] sm:$0xff]
    %v1247 = vld [vmem:[%s5 + $0x18] sm:$0xff]
    %1249 = vrot.lane.b32.xlu0 %v1239, 32
    %v1250 = vpop.permute.xlu0 %1249
    %v1251 = vsel %vm266, %v1250, 0
    %1253 = vmatprep.subr.mxu0 0.0
    %1254 = vmatpush1.msra.mxu0 %v1244
    %1255 = vmatprep.subr.mxu0 0.0
    %1256 = vmatpush1.msra.mxu0 %v1245
    %1257 = vmatprep.subr.mxu0 0.0
    %1258 = vmatpush1.msra.mxu0 %v1246
    %1259 = vmatprep.subr.mxu0 0.0
    %1260 = vmatpush1.msra.mxu0 %v1247
    %1261 = vmatprep.subr.mxu0 0.0
    %1262 = vmatpush1.msra.mxu0 0.0
    %1263 = vmatprep.subr.mxu0 0.0
    %1264 = vmatpush1.msra.mxu0 0.0
    %1265 = vmatprep.subr.mxu0 0.0
    %1266 = vmatpush1.msra.mxu0 0.0
    %1267 = vmatprep.subr.mxu0 0.0
    %1268 = vmatpush1.msra.mxu0 0.0
    %1269 = vmatprep.subr.mxu0 0.0
    %1270 = vmatpush1.msra.mxu0 0.0
    %1271 = vmatprep.subr.mxu0 0.0
    %1272 = vmatpush1.msra.mxu0 0.0
    %1273 = vmatprep.subr.mxu0 0.0
    %1274 = vmatpush1.msra.mxu0 0.0
    %1275 = vmatprep.subr.mxu0 0.0
    %1276 = vmatpush1.msra.mxu0 0.0
    %1277 = vmatprep.subr.mxu0 0.0
    %1278 = vmatpush1.msra.mxu0 0.0
    %1279 = vmatprep.subr.mxu0 0.0
    %1280 = vmatpush1.msra.mxu0 0.0
    %1281 = vmatprep.subr.mxu0 0.0
    %1282 = vmatpush1.msra.mxu0 0.0
    %1283 = vmatprep.subr.mxu0 0.0
    %1284 = vmatpush1.msra.mxu0 0.0
    %1285 = vmatprep.subr.mxu0 0.0
    %1286 = vmatpush1.msra.mxu0 0.0
    %1287 = vmatprep.subr.mxu0 0.0
    %1288 = vmatpush1.msra.mxu0 0.0
    %1289 = vmatprep.subr.mxu0 0.0
    %1290 = vmatpush1.msra.mxu0 0.0
    %1291 = vmatprep.subr.mxu0 0.0
    %1292 = vmatpush1.msra.mxu0 0.0
    %1293 = vmatprep.subr.mxu0 0.0
    %1294 = vmatpush1.msra.mxu0 0.0
    %1295 = vmatprep.subr.mxu0 0.0
    %1296 = vmatpush1.msra.mxu0 0.0
    %1297 = vmatprep.subr.mxu0 0.0
    %1298 = vmatpush1.msra.mxu0 0.0
    %1299 = vmatprep.subr.mxu0 0.0
    %1300 = vmatpush1.msra.mxu0 0.0
    %1301 = vmatprep.subr.mxu0 0.0
    %1302 = vmatpush1.msra.mxu0 0.0
    %1303 = vmatprep.subr.mxu0 0.0
    %1304 = vmatpush1.msra.mxu0 0.0
    %1305 = vmatprep.subr.mxu0 0.0
    %1306 = vmatpush1.msra.mxu0 0.0
    %1307 = vmatprep.subr.mxu0 0.0
    %1308 = vmatpush1.msra.mxu0 0.0
    %1309 = vmatprep.subr.mxu0 0.0
    %1310 = vmatpush1.msra.mxu0 0.0
    %1311 = vmatprep.subr.mxu0 0.0
    %1312 = vmatpush1.msra.mxu0 0.0
    %1313 = vmatprep.subr.mxu0 0.0
    %1314 = vmatpush1.msra.mxu0 0.0
    %1315 = vmatprep.subr.mxu0 0.0
    %1316 = vmatpush1.msra.mxu0 0.0
    %1317 = vmatprep.mubr.f32.mxu0 0.0
    %1318 = vmatmul.mubr.f32.gmra.mrb[0].mxu0 %v1251
    %v1319 = vpop.f32.mrb[0].mxu0
    %v1320 = vadd.f32 0.0, %v1319
    %v1321 = vpop.f32.mrb[0].mxu0
    %1322 = vdwg.mxu0
    %1324 = vrot.lane.b32.xlu0 %v1221, 32
    %v1325 = vpop.permute.xlu0 %1324
    %v1326 = vsel %vm266, %v1325, 0
    %1328 = vmatprep.subr.mxu0 0.0
    %1329 = vmatpush1.msra.mxu0 %v1240
    %1330 = vmatprep.subr.mxu0 0.0
    %1331 = vmatpush1.msra.mxu0 %v1241
    %1332 = vmatprep.subr.mxu0 0.0
    %1333 = vmatpush1.msra.mxu0 %v1242
    %1334 = vmatprep.subr.mxu0 0.0
    %1335 = vmatpush1.msra.mxu0 %v1243
    %1336 = vmatprep.subr.mxu0 0.0
    %1337 = vmatpush1.msra.mxu0 0.0
    %1338 = vmatprep.subr.mxu0 0.0
    %1339 = vmatpush1.msra.mxu0 0.0
    %1340 = vmatprep.subr.mxu0 0.0
    %1341 = vmatpush1.msra.mxu0 0.0
    %1342 = vmatprep.subr.mxu0 0.0
    %1343 = vmatpush1.msra.mxu0 0.0
    %1344 = vmatprep.subr.mxu0 0.0
    %1345 = vmatpush1.msra.mxu0 0.0
    %1346 = vmatprep.subr.mxu0 0.0
    %1347 = vmatpush1.msra.mxu0 0.0
    %1348 = vmatprep.subr.mxu0 0.0
    %1349 = vmatpush1.msra.mxu0 0.0
    %1350 = vmatprep.subr.mxu0 0.0
    %1351 = vmatpush1.msra.mxu0 0.0
    %1352 = vmatprep.subr.mxu0 0.0
    %1353 = vmatpush1.msra.mxu0 0.0
    %1354 = vmatprep.subr.mxu0 0.0
    %1355 = vmatpush1.msra.mxu0 0.0
    %1356 = vmatprep.subr.mxu0 0.0
    %1357 = vmatpush1.msra.mxu0 0.0
    %1358 = vmatprep.subr.mxu0 0.0
    %1359 = vmatpush1.msra.mxu0 0.0
    %1360 = vmatprep.subr.mxu0 0.0
    %1361 = vmatpush1.msra.mxu0 0.0
    %1362 = vmatprep.subr.mxu0 0.0
    %1363 = vmatpush1.msra.mxu0 0.0
    %1364 = vmatprep.subr.mxu0 0.0
    %1365 = vmatpush1.msra.mxu0 0.0
    %1366 = vmatprep.subr.mxu0 0.0
    %1367 = vmatpush1.msra.mxu0 0.0
    %1368 = vmatprep.subr.mxu0 0.0
    %1369 = vmatpush1.msra.mxu0 0.0
    %1370 = vmatprep.subr.mxu0 0.0
    %1371 = vmatpush1.msra.mxu0 0.0
    %1372 = vmatprep.subr.mxu0 0.0
    %1373 = vmatpush1.msra.mxu0 0.0
    %1374 = vmatprep.subr.mxu0 0.0
    %1375 = vmatpush1.msra.mxu0 0.0
    %1376 = vmatprep.subr.mxu0 0.0
    %1377 = vmatpush1.msra.mxu0 0.0
    %1378 = vmatprep.subr.mxu0 0.0
    %1379 = vmatpush1.msra.mxu0 0.0
    %1380 = vmatprep.subr.mxu0 0.0
    %1381 = vmatpush1.msra.mxu0 0.0
    %1382 = vmatprep.subr.mxu0 0.0
    %1383 = vmatpush1.msra.mxu0 0.0
    %1384 = vmatprep.subr.mxu0 0.0
    %1385 = vmatpush1.msra.mxu0 0.0
    %1386 = vmatprep.subr.mxu0 0.0
    %1387 = vmatpush1.msra.mxu0 0.0
    %1388 = vmatprep.subr.mxu0 0.0
    %1389 = vmatpush1.msra.mxu0 0.0
    %1390 = vmatprep.subr.mxu0 0.0
    %1391 = vmatpush1.msra.mxu0 0.0
    %1392 = vmatprep.mubr.f32.mxu0 0.0
    %1393 = vmatmul.mubr.f32.gmra.mrb[0].mxu0 %v1326
    %v1394 = vpop.f32.mrb[0].mxu0
    %v1395 = vadd.f32 %v1320, %v1394
    %v1396 = vpop.f32.mrb[0].mxu0
    %1397 = vdwg.mxu0
    %v1398 = vld [vmem:[#allocation2] sm:$0x1]
    %v1400 = vlaneseq
    %v1401 = vshrl.u32 %v1400, 7
    %v1402 = vsub.s32 0, %v1401
    %v1403 = vrot.slane %v1398, %v1402
    %v1405 = vadd.f32 %v1395, %v1403
    %v1406 = vmax.f32 %v1405, 0.0
    %v1407 = vld [vmem:[%s7] sm:$0xff]
    %v1408 = vld [vmem:[%s7 + $0x8] sm:$0xff]
    %v1409 = vld [vmem:[%s7 + $0x10] sm:$0xff]
    %v1410 = vld [vmem:[%s7 + $0x18] sm:$0xff]
    %v1411 = vld [vmem:[#allocation5] sm:$0x1]
    %v1413 = vlaneseq
    %v1414 = vshrl.u32 %v1413, 7
    %v1415 = vsub.s32 0, %v1414
    %v1416 = vrot.slane %v1411, %v1415
    %v1419 = vsel %vm266, %v1406, 0
    %1421 = vmatprep.subr.mxu0 0.0
    %1422 = vmatpush1.msra.mxu0 %v1407
    %1423 = vmatprep.subr.mxu0 0.0
    %1424 = vmatpush1.msra.mxu0 %v1408
    %1425 = vmatprep.subr.mxu0 0.0
    %1426 = vmatpush1.msra.mxu0 %v1409
    %1427 = vmatprep.subr.mxu0 0.0
    %1428 = vmatpush1.msra.mxu0 %v1410
    %1429 = vmatprep.subr.mxu0 0.0
    %1430 = vmatpush1.msra.mxu0 0.0
    %1431 = vmatprep.subr.mxu0 0.0
    %1432 = vmatpush1.msra.mxu0 0.0
    %1433 = vmatprep.subr.mxu0 0.0
    %1434 = vmatpush1.msra.mxu0 0.0
    %1435 = vmatprep.subr.mxu0 0.0
    %1436 = vmatpush1.msra.mxu0 0.0
    %1437 = vmatprep.subr.mxu0 0.0
    %1438 = vmatpush1.msra.mxu0 0.0
    %1439 = vmatprep.subr.mxu0 0.0
    %1440 = vmatpush1.msra.mxu0 0.0
    %1441 = vmatprep.subr.mxu0 0.0
    %1442 = vmatpush1.msra.mxu0 0.0
    %1443 = vmatprep.subr.mxu0 0.0
    %1444 = vmatpush1.msra.mxu0 0.0
    %1445 = vmatprep.subr.mxu0 0.0
    %1446 = vmatpush1.msra.mxu0 0.0
    %1447 = vmatprep.subr.mxu0 0.0
    %1448 = vmatpush1.msra.mxu0 0.0
    %1449 = vmatprep.subr.mxu0 0.0
    %1450 = vmatpush1.msra.mxu0 0.0
    %1451 = vmatprep.subr.mxu0 0.0
    %1452 = vmatpush1.msra.mxu0 0.0
    %1453 = vmatprep.subr.mxu0 0.0
    %1454 = vmatpush1.msra.mxu0 0.0
    %1455 = vmatprep.subr.mxu0 0.0
    %1456 = vmatpush1.msra.mxu0 0.0
    %1457 = vmatprep.subr.mxu0 0.0
    %1458 = vmatpush1.msra.mxu0 0.0
    %1459 = vmatprep.subr.mxu0 0.0
    %1460 = vmatpush1.msra.mxu0 0.0
    %1461 = vmatprep.subr.mxu0 0.0
    %1462 = vmatpush1.msra.mxu0 0.0
    %1463 = vmatprep.subr.mxu0 0.0
    %1464 = vmatpush1.msra.mxu0 0.0
    %1465 = vmatprep.subr.mxu0 0.0
    %1466 = vmatpush1.msra.mxu0 0.0
    %1467 = vmatprep.subr.mxu0 0.0
    %1468 = vmatpush1.msra.mxu0 0.0
    %1469 = vmatprep.subr.mxu0 0.0
    %1470 = vmatpush1.msra.mxu0 0.0
    %1471 = vmatprep.subr.mxu0 0.0
    %1472 = vmatpush1.msra.mxu0 0.0
    %1473 = vmatprep.subr.mxu0 0.0
    %1474 = vmatpush1.msra.mxu0 0.0
    %1475 = vmatprep.subr.mxu0 0.0
    %1476 = vmatpush1.msra.mxu0 0.0
    %1477 = vmatprep.subr.mxu0 0.0
    %1478 = vmatpush1.msra.mxu0 0.0
    %1479 = vmatprep.subr.mxu0 0.0
    %1480 = vmatpush1.msra.mxu0 0.0
    %1481 = vmatprep.subr.mxu0 0.0
    %1482 = vmatpush1.msra.mxu0 0.0
    %1483 = vmatprep.subr.mxu0 0.0
    %1484 = vmatpush1.msra.mxu0 0.0
    %1485 = vmatprep.mubr.f32.mxu0 0.0
    %1486 = vmatmul.mubr.f32.gmra.mrb[0].mxu0 %v1419
    %v1487 = vpop.f32.mrb[0].mxu0
    %v1488 = vadd.f32 %v1416, %v1487
    %v1489 = vpop.f32.mrb[0].mxu0
    %1490 = vdwg.mxu0
    %vm1491 = vcmask 17408
    %v1492 = vsel %vm1491, %v1488, -inf
    %1493 = vmax.xlane.f32.xlu0 %v1492
    %v1494 = vpop.xlane.xlu0 %1493
    %v1495 = vsub.f32 %v1488, %v1494
    %v1496 = vmul.f32 %v1495, 1.442695
    %v1497 = vpow.pop %v1496
    %v1498 = vsel %vm1491, %v1497, 0.0
    %1499 = vadd.xlane.f32.xlu0 %v1498
    %v1500 = vpop.xlane.xlu0 %1499
    %v1501 = vrcp.pop %v1500
    %v1502 = vmul.f32 %v1497, %v1501
    %1503 = vst.msk [vmem:[#allocation7] sm:$0x3] %vm1491, %v1502
    // Predicated region
    $region46: #{bilstm_classifier_forward.1} parent=1 // pred_check
      _
    $region47: #{bilstm_classifier_forward.1} parent=1 // pred_check_branch
      %1505 = sbr.rel (0) target = $region49
    $region48: #{bilstm_classifier_forward.1} parent=1 // pred_region
      %s1507 = ssub.s32 32, 32
      %1508 = vsyncadd [#allocation4], %s1507
      %s1510 = sshll.u32 [#allocation7], 4
      %s1511 = int_to_ptr.vmem [resolvable:$true] %s1510
      %1513 = dma.vmem_to_hbm [thread:$0]  %s1511, 32, %s9, [#allocation4]
    $region49: #{bilstm_classifier_forward.1} parent=1 // pred_fallthru
      _
    // Predicated region
    $region50: #{bilstm_classifier_forward.1} parent=1 // pred_check
      _
    $region51: #{bilstm_classifier_forward.1} parent=1 // pred_check_branch
      %1515 = sbr.rel (0) target = $region53
    $region52: #{bilstm_classifier_forward.1} parent=1 // pred_region
      %1516 = dma.done [#allocation4], 32
    $region53: #{bilstm_classifier_forward.1} parent=1 // pred_fallthru
      _
    %1517 = vsyncpa [#allocation3], 1
    %1518 = vsyncpa [#allocation6], 1
    %1519 = vsyncpa [#allocation4], 1

</llo_original>
